<compile_context>
chip_gen: v7x
topology: tpu7x:2x2x1
jax: 0.10.0
libtpu: 0.0.40
codegen_flags: <defaults>
</compile_context>

<pallas_src>
import functools
import math

import jax
import jax.numpy as jnp
from jax.experimental import pallas as pl
from jax.experimental.pallas import tpu as pltpu


# ----------------------------------------------------------------------------
# Fused kernel: all LSTM layers + final Linear, everything resident in VMEM.
# ----------------------------------------------------------------------------
def _fused_lstm_kernel(num_layers, S, B_pad, H, *refs):
    # refs = [x, (wih, whh, bias) * num_layers, wlin, blin, out, act_sc, hseq_sc]
    x_ref = refs[0]
    layer_refs = refs[1:1 + 3 * num_layers]
    wlin_ref, blin_ref, out_ref, act_sc, hseq_sc = refs[1 + 3 * num_layers:]

    f32 = jnp.float32
    bf16 = jnp.bfloat16
    four_h = 4 * H

    # Hoisted constants for the fused gate nonlinearity (built once, not per
    # step -- broadcast_in_dim is not CSE'd).  PyTorch gate order is
    # [i, f, g, o]; lanes [2H:3H) (the "g" gate) take a plain tanh, the other
    # lanes take sigmoid(x) = 0.5 * (tanh(x/2) + 1).
    lane = jax.lax.broadcasted_iota(jnp.int32, (1, four_h), 1)
    is_g = jnp.logical_and(lane >= 2 * H, lane < 3 * H)
    scale = jnp.where(is_g, 1.0, 0.5).astype(f32)   # pre- and post-scale
    shift = jnp.where(is_g, 0.0, 0.5).astype(f32)

    cur_in = x_ref[...]                              # (S*B_pad, in_dim) bf16

    for layer in range(num_layers):
        wih = layer_refs[3 * layer][...]             # (in_dim, 4H) bf16
        whh = layer_refs[3 * layer + 1][...]         # (H, 4H)      bf16
        bias = layer_refs[3 * layer + 2][...]        # (1, 4H)      f32

        # Hoisted input projection for ALL timesteps: one dense MXU matmul
        # instead of S tiny ones on the serial recurrence path.
        act_sc[...] = (
            jnp.dot(cur_in, wih, preferred_element_type=f32) + bias
        )                                            # (S*B_pad, 4H) f32

        def step(t, carry, whh=whh):
            h_prev, c_prev = carry                   # (B_pad, H) f32
            row = pl.multiple_of(t * B_pad, B_pad)   # sublane-aligned slice
            gates = act_sc[pl.ds(row, B_pad), :] + jnp.dot(
                h_prev.astype(bf16), whh, preferred_element_type=f32)
            # One full-vreg tanh on the EUP + cheap VPU affine:
            # act = [sigmoid(i), sigmoid(f), tanh(g), sigmoid(o)]
            act = jnp.tanh(gates * scale) * scale + shift
            i_g = act[:, 0 * H:1 * H]
            f_g = act[:, 1 * H:2 * H]
            g_g = act[:, 2 * H:3 * H]
            o_g = act[:, 3 * H:4 * H]
            c_new = f_g * c_prev + i_g * g_g
            h_new = o_g * jnp.tanh(c_new)
            hseq_sc[pl.ds(row, B_pad), :] = h_new    # stays in VMEM
            return h_new, c_new

        zeros = jnp.zeros((B_pad, H), f32)
        jax.lax.fori_loop(0, S, step, (zeros, zeros), unroll=True)

        # Next layer consumes this layer's hidden sequence straight from VMEM.
        cur_in = hseq_sc[...].astype(bf16)

    # Final Linear over the flattened sequence: matches x.view(s*b, h) @ W^T + b.
    out_ref[...] = (
        jnp.dot(hseq_sc[...], wlin_ref[...], preferred_element_type=f32)
        + blin_ref[...]
    )


# ----------------------------------------------------------------------------
# Full model forward (matches LSTMModel.forward)
# ----------------------------------------------------------------------------
def lstm_model_forward(x, params):
    S, B, I = x.shape
    H = params["lstm"][0]["w_hh"].shape[1]
    O = params["linear"]["w"].shape[0]
    num_layers = len(params["lstm"])
    B_pad = ((B + 7) // 8) * 8                      # sublane width

    # Pad batch to sublane width once, flatten (seq, batch) and cast the MXU
    # operand to bf16 (halves DMA traffic, native MXU dtype on v5e/v6e/v7x).
    x_p = jnp.zeros((S, B_pad, I), jnp.float32).at[:, :B, :].set(
        x.astype(jnp.float32))
    x2d = x_p.reshape(S * B_pad, I).astype(jnp.bfloat16)

    inputs = [x2d]
    in_specs = [pl.BlockSpec((S * B_pad, I), lambda: (0, 0))]
    for lp in params["lstm"]:
        wih_t = jnp.asarray(lp["w_ih"], jnp.float32).T.astype(jnp.bfloat16)
        whh_t = jnp.asarray(lp["w_hh"], jnp.float32).T.astype(jnp.bfloat16)
        bias = (jnp.asarray(lp["b_ih"], jnp.float32)
                + jnp.asarray(lp["b_hh"], jnp.float32)).reshape(1, 4 * H)
        inputs += [wih_t, whh_t, bias]
        in_specs += [
            pl.BlockSpec(wih_t.shape, lambda: (0, 0)),
            pl.BlockSpec(whh_t.shape, lambda: (0, 0)),
            pl.BlockSpec(bias.shape, lambda: (0, 0)),
        ]
    wlin_t = jnp.asarray(params["linear"]["w"], jnp.float32).T      # (H, O)
    blin = jnp.asarray(params["linear"]["b"], jnp.float32).reshape(1, O)
    inputs += [wlin_t, blin]
    in_specs += [pl.BlockSpec(wlin_t.shape, lambda: (0, 0)),
                 pl.BlockSpec(blin.shape, lambda: (0, 0))]

    kernel = functools.partial(_fused_lstm_kernel, num_layers, S, B_pad, H)

    y2d = pl.pallas_call(
        kernel,
        out_shape=jax.ShapeDtypeStruct((S * B_pad, O), jnp.float32),
        in_specs=in_specs,
        out_specs=pl.BlockSpec((S * B_pad, O), lambda: (0, 0)),
        scratch_shapes=[
            pltpu.VMEM((S * B_pad, 4 * H), jnp.float32),  # hoisted projections
            pltpu.VMEM((S * B_pad, H), jnp.float32),      # hidden sequence
        ],
    )(*inputs)

    return y2d.reshape(S, B_pad, O)[:, :B, :]             # drop batch padding


# ----------------------------------------------------------------------------
# Pure-JAX reference (exact f32 math, for sanity check only)
# ----------------------------------------------------------------------------
def lstm_model_reference(x, params):
    h_seq = x.astype(jnp.float32)
    for layer_p in params["lstm"]:
        w_ih = layer_p["w_ih"].astype(jnp.float32)
        w_hh = layer_p["w_hh"].astype(jnp.float32)
        bias = layer_p["b_ih"].astype(jnp.float32) + layer_p["b_hh"].astype(jnp.float32)
        H = w_hh.shape[1]
        B = h_seq.shape[1]

        def step(carry, x_t):
            h_prev, c_prev = carry
            gates = x_t @ w_ih.T + h_prev @ w_hh.T + bias
            i_g = jax.nn.sigmoid(gates[:, 0 * H:1 * H])
            f_g = jax.nn.sigmoid(gates[:, 1 * H:2 * H])
            g_g = jnp.tanh(gates[:, 2 * H:3 * H])
            o_g = jax.nn.sigmoid(gates[:, 3 * H:4 * H])
            c_new = f_g * c_prev + i_g * g_g
            h_new = o_g * jnp.tanh(c_new)
            return (h_new, c_new), h_new

        init = (jnp.zeros((B, H), jnp.float32), jnp.zeros((B, H), jnp.float32))
        _, h_seq = jax.lax.scan(step, init, h_seq)

    s, b, hdim = h_seq.shape
    y = h_seq.reshape(s * b, hdim) @ params["linear"]["w"].T.astype(jnp.float32)
    y = y + params["linear"]["b"].astype(jnp.float32)
    return y.reshape(s, b, -1)


# ----------------------------------------------------------------------------
# Deterministic parameter init (mimics PyTorch uniform(-1/sqrt(H), 1/sqrt(H)))
# ----------------------------------------------------------------------------
def init_params(key, input_size, hidden_size, num_layers, output_dim):
    k = 1.0 / math.sqrt(hidden_size)
    params = {"lstm": []}
    for layer in range(num_layers):
        in_dim = input_size if layer == 0 else hidden_size
        key, k1, k2, k3, k4 = jax.random.split(key, 5)
        params["lstm"].append({
            "w_ih": jax.random.uniform(k1, (4 * hidden_size, in_dim),
                                       jnp.float32, -k, k),
            "w_hh": jax.random.uniform(k2, (4 * hidden_size, hidden_size),
                                       jnp.float32, -k, k),
            "b_ih": jax.random.uniform(k3, (4 * hidden_size,),
                                       jnp.float32, -k, k),
            "b_hh": jax.random.uniform(k4, (4 * hidden_size,),
                                       jnp.float32, -k, k),
        })
    key, k1, k2 = jax.random.split(key, 3)
    params["linear"] = {
        "w": jax.random.uniform(k1, (output_dim, hidden_size),
                                jnp.float32, -k, k),
        "b": jax.random.uniform(k2, (output_dim,), jnp.float32, -k, k),
    }
    return params


if __name__ == "__main__":
    SEQ, BATCH = 8, 2
    INPUT_SIZE, HIDDEN_SIZE, NUM_LAYERS, OUTPUT_DIM = 16, 32, 2, 1

    key = jax.random.PRNGKey(0)
    key, pkey, xkey = jax.random.split(key, 3)
    params = init_params(pkey, INPUT_SIZE, HIDDEN_SIZE, NUM_LAYERS, OUTPUT_DIM)

    # layout: (seq, batch, input_size)
    x = jax.random.normal(xkey, (SEQ, BATCH, INPUT_SIZE), jnp.float32)

    forward = jax.jit(lstm_model_forward)
    y = jax.block_until_ready(forward(x, params))
    assert y.shape == (SEQ, BATCH, OUTPUT_DIM), y.shape

    y_ref = jax.block_until_ready(lstm_model_reference(x, params))
    err = float(jnp.max(jnp.abs(y - y_ref)))
    # bf16 MXU operands (f32 accumulation) => loosened tolerance vs f32 ref.
    assert err < 3e-2, f"max err {err}"
    print("KERNEL_OK")
</pallas_src>

<mosaic_0001>
module attributes {stable_mosaic.version = 11 : i64} {
  func.func @_fused_lstm_kernel(%arg0: memref<64x16xbf16, #tpu.memory_space<vmem>>, %arg1: memref<16x128xbf16, #tpu.memory_space<vmem>>, %arg2: memref<32x128xbf16, #tpu.memory_space<vmem>>, %arg3: memref<1x128xf32, #tpu.memory_space<vmem>>, %arg4: memref<32x128xbf16, #tpu.memory_space<vmem>>, %arg5: memref<32x128xbf16, #tpu.memory_space<vmem>>, %arg6: memref<1x128xf32, #tpu.memory_space<vmem>>, %arg7: memref<32x1xf32, #tpu.memory_space<vmem>>, %arg8: memref<1x1xf32, #tpu.memory_space<vmem>>, %arg9: memref<64x1xf32, #tpu.memory_space<vmem>>, %arg10: memref<64x128xf32, #tpu.memory_space<vmem>>, %arg11: memref<64x32xf32, #tpu.memory_space<vmem>>) attributes {dimension_semantics = [], scalar_prefetch = 0 : i64, scratch_operands = 2 : i64, tpu.core_type = #tpu.core_type<tc>} {
    %0 = tpu.iota {dimensions = array<i32: 1>} : vector<1x128xi32>
    %c64_i32 = arith.constant 64 : i32
    %1 = vector.broadcast %c64_i32 : i32 to vector<1x128xi32>
    %2 = arith.cmpi sge, %0, %1 : vector<1x128xi32>
    %c96_i32 = arith.constant 96 : i32
    %3 = vector.broadcast %c96_i32 : i32 to vector<1x128xi32>
    %4 = arith.cmpi slt, %0, %3 : vector<1x128xi32>
    %5 = arith.andi %2, %4 : vector<1x128xi1>
    %cst = arith.constant 1.000000e+00 : f32
    %cst_0 = arith.constant 5.000000e-01 : f32
    %6 = vector.broadcast %cst : f32 to vector<1x128xf32>
    %7 = vector.broadcast %cst_0 : f32 to vector<1x128xf32>
    %8 = arith.select %5, %6, %7 : vector<1x128xi1>, vector<1x128xf32>
    %cst_1 = arith.constant 0.000000e+00 : f32
    %cst_2 = arith.constant 5.000000e-01 : f32
    %9 = vector.broadcast %cst_1 : f32 to vector<1x128xf32>
    %10 = vector.broadcast %cst_2 : f32 to vector<1x128xf32>
    %11 = arith.select %5, %9, %10 : vector<1x128xi1>, vector<1x128xf32>
    %c0 = arith.constant 0 : index
    %c0_3 = arith.constant 0 : index
    %12 = vector.load %arg0[%c0, %c0_3] : memref<64x16xbf16, #tpu.memory_space<vmem>>, vector<64x16xbf16>
    %c0_4 = arith.constant 0 : index
    %c0_5 = arith.constant 0 : index
    %13 = vector.load %arg1[%c0_4, %c0_5] : memref<16x128xbf16, #tpu.memory_space<vmem>>, vector<16x128xbf16>
    %c0_6 = arith.constant 0 : index
    %c0_7 = arith.constant 0 : index
    %14 = vector.load %arg2[%c0_6, %c0_7] : memref<32x128xbf16, #tpu.memory_space<vmem>>, vector<32x128xbf16>
    %c0_8 = arith.constant 0 : index
    %c0_9 = arith.constant 0 : index
    %15 = vector.load %arg3[%c0_8, %c0_9] : memref<1x128xf32, #tpu.memory_space<vmem>>, vector<1x128xf32>
    %cst_10 = arith.constant dense<0.000000e+00> : vector<64x128xf32>
    %16 = tpu.matmul %12, %13, %cst_10 {dimension_numbers = #tpu.dot_dimension_numbers<[1], [0], [0], [1], [0, 0, 1, 1], [], []>} : vector<64x16xbf16>, vector<16x128xbf16>, vector<64x128xf32> -> vector<64x128xf32>
    %17 = vector.broadcast %15 : vector<1x128xf32> to vector<64x128xf32>
    %18 = arith.addf %16, %17 : vector<64x128xf32>
    %c0_11 = arith.constant 0 : index
    %c0_12 = arith.constant 0 : index
    %19 = vector.load %arg10[%c0_11, %c0_12] : memref<64x128xf32, #tpu.memory_space<vmem>>, vector<64x128xf32>
    tpu.vector_store %arg10[%c0_11, %c0_12], %18 {strides = array<i32>} : memref<64x128xf32, #tpu.memory_space<vmem>>, vector<64x128xf32>,
    %cst_13 = arith.constant 0.000000e+00 : f32
    %20 = vector.broadcast %cst_13 : f32 to vector<8x32xf32>
    %c0_i32 = arith.constant 0 : i32
    %c8_i32 = arith.constant 8 : i32
    %21 = arith.muli %c0_i32, %c8_i32 : i32
    %22 = tpu.assume_multiple %21, 8 : i32
    %23 = arith.index_cast %22 : i32 to index
    %c0_14 = arith.constant 0 : index
    %24 = vector.load %arg10[%23, %c0_14] : memref<64x128xf32, #tpu.memory_space<vmem>>, vector<8x128xf32>
    %25 = arith.truncf %20 : vector<8x32xf32> to vector<8x32xbf16>
    %cst_15 = arith.constant dense<0.000000e+00> : vector<8x128xf32>
    %26 = tpu.matmul %25, %14, %cst_15 {dimension_numbers = #tpu.dot_dimension_numbers<[1], [0], [0], [1], [0, 0, 1, 1], [], []>} : vector<8x32xbf16>, vector<32x128xbf16>, vector<8x128xf32> -> vector<8x128xf32>
    %27 = arith.addf %24, %26 : vector<8x128xf32>
    %28 = vector.broadcast %8 : vector<1x128xf32> to vector<8x128xf32>
    %29 = arith.mulf %27, %28 : vector<8x128xf32>
    %30 = math.tanh %29 : vector<8x128xf32>
    %31 = vector.broadcast %8 : vector<1x128xf32> to vector<8x128xf32>
    %32 = arith.mulf %30, %31 : vector<8x128xf32>
    %33 = vector.broadcast %11 : vector<1x128xf32> to vector<8x128xf32>
    %34 = arith.addf %32, %33 : vector<8x128xf32>
    %35 = vector.extract_strided_slice %34 {offsets = [0, 0], sizes = [8, 32], strides = [1, 1]} : vector<8x128xf32> to vector<8x32xf32>
    %36 = vector.extract_strided_slice %34 {offsets = [0, 32], sizes = [8, 32], strides = [1, 1]} : vector<8x128xf32> to vector<8x32xf32>
    %37 = vector.extract_strided_slice %34 {offsets = [0, 64], sizes = [8, 32], strides = [1, 1]} : vector<8x128xf32> to vector<8x32xf32>
    %38 = vector.extract_strided_slice %34 {offsets = [0, 96], sizes = [8, 32], strides = [1, 1]} : vector<8x128xf32> to vector<8x32xf32>
    %39 = arith.mulf %36, %20 : vector<8x32xf32>
    %40 = arith.mulf %35, %37 : vector<8x32xf32>
    %41 = arith.addf %39, %40 : vector<8x32xf32>
    %42 = math.tanh %41 : vector<8x32xf32>
    %43 = arith.mulf %38, %42 : vector<8x32xf32>
    %44 = arith.index_cast %22 : i32 to index
    %c0_16 = arith.constant 0 : index
    %45 = vector.load %arg11[%44, %c0_16] : memref<64x32xf32, #tpu.memory_space<vmem>>, vector<8x32xf32>
    tpu.vector_store %arg11[%44, %c0_16], %43 {strides = array<i32>} : memref<64x32xf32, #tpu.memory_space<vmem>>, vector<8x32xf32>,
    %c1_i32 = arith.constant 1 : i32
    %c8_i32_17 = arith.constant 8 : i32
    %46 = arith.muli %c1_i32, %c8_i32_17 : i32
    %47 = tpu.assume_multiple %46, 8 : i32
    %48 = arith.index_cast %47 : i32 to index
    %c0_18 = arith.constant 0 : index
    %49 = vector.load %arg10[%48, %c0_18] : memref<64x128xf32, #tpu.memory_space<vmem>>, vector<8x128xf32>
    %50 = arith.truncf %43 : vector<8x32xf32> to vector<8x32xbf16>
    %cst_19 = arith.constant dense<0.000000e+00> : vector<8x128xf32>
    %51 = tpu.matmul %50, %14, %cst_19 {dimension_numbers = #tpu.dot_dimension_numbers<[1], [0], [0], [1], [0, 0, 1, 1], [], []>} : vector<8x32xbf16>, vector<32x128xbf16>, vector<8x128xf32> -> vector<8x128xf32>
    %52 = arith.addf %49, %51 : vector<8x128xf32>
    %53 = vector.broadcast %8 : vector<1x128xf32> to vector<8x128xf32>
    %54 = arith.mulf %52, %53 : vector<8x128xf32>
    %55 = math.tanh %54 : vector<8x128xf32>
    %56 = vector.broadcast %8 : vector<1x128xf32> to vector<8x128xf32>
    %57 = arith.mulf %55, %56 : vector<8x128xf32>
    %58 = vector.broadcast %11 : vector<1x128xf32> to vector<8x128xf32>
    %59 = arith.addf %57, %58 : vector<8x128xf32>
    %60 = vector.extract_strided_slice %59 {offsets = [0, 0], sizes = [8, 32], strides = [1, 1]} : vector<8x128xf32> to vector<8x32xf32>
    %61 = vector.extract_strided_slice %59 {offsets = [0, 32], sizes = [8, 32], strides = [1, 1]} : vector<8x128xf32> to vector<8x32xf32>
    %62 = vector.extract_strided_slice %59 {offsets = [0, 64], sizes = [8, 32], strides = [1, 1]} : vector<8x128xf32> to vector<8x32xf32>
    %63 = vector.extract_strided_slice %59 {offsets = [0, 96], sizes = [8, 32], strides = [1, 1]} : vector<8x128xf32> to vector<8x32xf32>
    %64 = arith.mulf %61, %41 : vector<8x32xf32>
    %65 = arith.mulf %60, %62 : vector<8x32xf32>
    %66 = arith.addf %64, %65 : vector<8x32xf32>
    %67 = math.tanh %66 : vector<8x32xf32>
    %68 = arith.mulf %63, %67 : vector<8x32xf32>
    %69 = arith.index_cast %47 : i32 to index
    %c0_20 = arith.constant 0 : index
    %70 = vector.load %arg11[%69, %c0_20] : memref<64x32xf32, #tpu.memory_space<vmem>>, vector<8x32xf32>
    tpu.vector_store %arg11[%69, %c0_20], %68 {strides = array<i32>} : memref<64x32xf32, #tpu.memory_space<vmem>>, vector<8x32xf32>,
    %c2_i32 = arith.constant 2 : i32
    %c8_i32_21 = arith.constant 8 : i32
    %71 = arith.muli %c2_i32, %c8_i32_21 : i32
    %72 = tpu.assume_multiple %71, 8 : i32
    %73 = arith.index_cast %72 : i32 to index
    %c0_22 = arith.constant 0 : index
    %74 = vector.load %arg10[%73, %c0_22] : memref<64x128xf32, #tpu.memory_space<vmem>>, vector<8x128xf32>
    %75 = arith.truncf %68 : vector<8x32xf32> to vector<8x32xbf16>
    %cst_23 = arith.constant dense<0.000000e+00> : vector<8x128xf32>
    %76 = tpu.matmul %75, %14, %cst_23 {dimension_numbers = #tpu.dot_dimension_numbers<[1], [0], [0], [1], [0, 0, 1, 1], [], []>} : vector<8x32xbf16>, vector<32x128xbf16>, vector<8x128xf32> -> vector<8x128xf32>
    %77 = arith.addf %74, %76 : vector<8x128xf32>
    %78 = vector.broadcast %8 : vector<1x128xf32> to vector<8x128xf32>
    %79 = arith.mulf %77, %78 : vector<8x128xf32>
    %80 = math.tanh %79 : vector<8x128xf32>
    %81 = vector.broadcast %8 : vector<1x128xf32> to vector<8x128xf32>
    %82 = arith.mulf %80, %81 : vector<8x128xf32>
    %83 = vector.broadcast %11 : vector<1x128xf32> to vector<8x128xf32>
    %84 = arith.addf %82, %83 : vector<8x128xf32>
    %85 = vector.extract_strided_slice %84 {offsets = [0, 0], sizes = [8, 32], strides = [1, 1]} : vector<8x128xf32> to vector<8x32xf32>
    %86 = vector.extract_strided_slice %84 {offsets = [0, 32], sizes = [8, 32], strides = [1, 1]} : vector<8x128xf32> to vector<8x32xf32>
    %87 = vector.extract_strided_slice %84 {offsets = [0, 64], sizes = [8, 32], strides = [1, 1]} : vector<8x128xf32> to vector<8x32xf32>
    %88 = vector.extract_strided_slice %84 {offsets = [0, 96], sizes = [8, 32], strides = [1, 1]} : vector<8x128xf32> to vector<8x32xf32>
    %89 = arith.mulf %86, %66 : vector<8x32xf32>
    %90 = arith.mulf %85, %87 : vector<8x32xf32>
    %91 = arith.addf %89, %90 : vector<8x32xf32>
    %92 = math.tanh %91 : vector<8x32xf32>
    %93 = arith.mulf %88, %92 : vector<8x32xf32>
    %94 = arith.index_cast %72 : i32 to index
    %c0_24 = arith.constant 0 : index
    %95 = vector.load %arg11[%94, %c0_24] : memref<64x32xf32, #tpu.memory_space<vmem>>, vector<8x32xf32>
    tpu.vector_store %arg11[%94, %c0_24], %93 {strides = array<i32>} : memref<64x32xf32, #tpu.memory_space<vmem>>, vector<8x32xf32>,
    %c3_i32 = arith.constant 3 : i32
    %c8_i32_25 = arith.constant 8 : i32
    %96 = arith.muli %c3_i32, %c8_i32_25 : i32
    %97 = tpu.assume_multiple %96, 8 : i32
    %98 = arith.index_cast %97 : i32 to index
    %c0_26 = arith.constant 0 : index
    %99 = vector.load %arg10[%98, %c0_26] : memref<64x128xf32, #tpu.memory_space<vmem>>, vector<8x128xf32>
    %100 = arith.truncf %93 : vector<8x32xf32> to vector<8x32xbf16>
    %cst_27 = arith.constant dense<0.000000e+00> : vector<8x128xf32>
    %101 = tpu.matmul %100, %14, %cst_27 {dimension_numbers = #tpu.dot_dimension_numbers<[1], [0], [0], [1], [0, 0, 1, 1], [], []>} : vector<8x32xbf16>, vector<32x128xbf16>, vector<8x128xf32> -> vector<8x128xf32>
    %102 = arith.addf %99, %101 : vector<8x128xf32>
    %103 = vector.broadcast %8 : vector<1x128xf32> to vector<8x128xf32>
    %104 = arith.mulf %102, %103 : vector<8x128xf32>
    %105 = math.tanh %104 : vector<8x128xf32>
    %106 = vector.broadcast %8 : vector<1x128xf32> to vector<8x128xf32>
    %107 = arith.mulf %105, %106 : vector<8x128xf32>
    %108 = vector.broadcast %11 : vector<1x128xf32> to vector<8x128xf32>
    %109 = arith.addf %107, %108 : vector<8x128xf32>
    %110 = vector.extract_strided_slice %109 {offsets = [0, 0], sizes = [8, 32], strides = [1, 1]} : vector<8x128xf32> to vector<8x32xf32>
    %111 = vector.extract_strided_slice %109 {offsets = [0, 32], sizes = [8, 32], strides = [1, 1]} : vector<8x128xf32> to vector<8x32xf32>
    %112 = vector.extract_strided_slice %109 {offsets = [0, 64], sizes = [8, 32], strides = [1, 1]} : vector<8x128xf32> to vector<8x32xf32>
    %113 = vector.extract_strided_slice %109 {offsets = [0, 96], sizes = [8, 32], strides = [1, 1]} : vector<8x128xf32> to vector<8x32xf32>
    %114 = arith.mulf %111, %91 : vector<8x32xf32>
    %115 = arith.mulf %110, %112 : vector<8x32xf32>
    %116 = arith.addf %114, %115 : vector<8x32xf32>
    %117 = math.tanh %116 : vector<8x32xf32>
    %118 = arith.mulf %113, %117 : vector<8x32xf32>
    %119 = arith.index_cast %97 : i32 to index
    %c0_28 = arith.constant 0 : index
    %120 = vector.load %arg11[%119, %c0_28] : memref<64x32xf32, #tpu.memory_space<vmem>>, vector<8x32xf32>
    tpu.vector_store %arg11[%119, %c0_28], %118 {strides = array<i32>} : memref<64x32xf32, #tpu.memory_space<vmem>>, vector<8x32xf32>,
    %c4_i32 = arith.constant 4 : i32
    %c8_i32_29 = arith.constant 8 : i32
    %121 = arith.muli %c4_i32, %c8_i32_29 : i32
    %122 = tpu.assume_multiple %121, 8 : i32
    %123 = arith.index_cast %122 : i32 to index
    %c0_30 = arith.constant 0 : index
    %124 = vector.load %arg10[%123, %c0_30] : memref<64x128xf32, #tpu.memory_space<vmem>>, vector<8x128xf32>
    %125 = arith.truncf %118 : vector<8x32xf32> to vector<8x32xbf16>
    %cst_31 = arith.constant dense<0.000000e+00> : vector<8x128xf32>
    %126 = tpu.matmul %125, %14, %cst_31 {dimension_numbers = #tpu.dot_dimension_numbers<[1], [0], [0], [1], [0, 0, 1, 1], [], []>} : vector<8x32xbf16>, vector<32x128xbf16>, vector<8x128xf32> -> vector<8x128xf32>
    %127 = arith.addf %124, %126 : vector<8x128xf32>
    %128 = vector.broadcast %8 : vector<1x128xf32> to vector<8x128xf32>
    %129 = arith.mulf %127, %128 : vector<8x128xf32>
    %130 = math.tanh %129 : vector<8x128xf32>
    %131 = vector.broadcast %8 : vector<1x128xf32> to vector<8x128xf32>
    %132 = arith.mulf %130, %131 : vector<8x128xf32>
    %133 = vector.broadcast %11 : vector<1x128xf32> to vector<8x128xf32>
    %134 = arith.addf %132, %133 : vector<8x128xf32>
    %135 = vector.extract_strided_slice %134 {offsets = [0, 0], sizes = [8, 32], strides = [1, 1]} : vector<8x128xf32> to vector<8x32xf32>
    %136 = vector.extract_strided_slice %134 {offsets = [0, 32], sizes = [8, 32], strides = [1, 1]} : vector<8x128xf32> to vector<8x32xf32>
    %137 = vector.extract_strided_slice %134 {offsets = [0, 64], sizes = [8, 32], strides = [1, 1]} : vector<8x128xf32> to vector<8x32xf32>
    %138 = vector.extract_strided_slice %134 {offsets = [0, 96], sizes = [8, 32], strides = [1, 1]} : vector<8x128xf32> to vector<8x32xf32>
    %139 = arith.mulf %136, %116 : vector<8x32xf32>
    %140 = arith.mulf %135, %137 : vector<8x32xf32>
    %141 = arith.addf %139, %140 : vector<8x32xf32>
    %142 = math.tanh %141 : vector<8x32xf32>
    %143 = arith.mulf %138, %142 : vector<8x32xf32>
    %144 = arith.index_cast %122 : i32 to index
    %c0_32 = arith.constant 0 : index
    %145 = vector.load %arg11[%144, %c0_32] : memref<64x32xf32, #tpu.memory_space<vmem>>, vector<8x32xf32>
    tpu.vector_store %arg11[%144, %c0_32], %143 {strides = array<i32>} : memref<64x32xf32, #tpu.memory_space<vmem>>, vector<8x32xf32>,
    %c5_i32 = arith.constant 5 : i32
    %c8_i32_33 = arith.constant 8 : i32
    %146 = arith.muli %c5_i32, %c8_i32_33 : i32
    %147 = tpu.assume_multiple %146, 8 : i32
    %148 = arith.index_cast %147 : i32 to index
    %c0_34 = arith.constant 0 : index
    %149 = vector.load %arg10[%148, %c0_34] : memref<64x128xf32, #tpu.memory_space<vmem>>, vector<8x128xf32>
    %150 = arith.truncf %143 : vector<8x32xf32> to vector<8x32xbf16>
    %cst_35 = arith.constant dense<0.000000e+00> : vector<8x128xf32>
    %151 = tpu.matmul %150, %14, %cst_35 {dimension_numbers = #tpu.dot_dimension_numbers<[1], [0], [0], [1], [0, 0, 1, 1], [], []>} : vector<8x32xbf16>, vector<32x128xbf16>, vector<8x128xf32> -> vector<8x128xf32>
    %152 = arith.addf %149, %151 : vector<8x128xf32>
    %153 = vector.broadcast %8 : vector<1x128xf32> to vector<8x128xf32>
    %154 = arith.mulf %152, %153 : vector<8x128xf32>
    %155 = math.tanh %154 : vector<8x128xf32>
    %156 = vector.broadcast %8 : vector<1x128xf32> to vector<8x128xf32>
    %157 = arith.mulf %155, %156 : vector<8x128xf32>
    %158 = vector.broadcast %11 : vector<1x128xf32> to vector<8x128xf32>
    %159 = arith.addf %157, %158 : vector<8x128xf32>
    %160 = vector.extract_strided_slice %159 {offsets = [0, 0], sizes = [8, 32], strides = [1, 1]} : vector<8x128xf32> to vector<8x32xf32>
    %161 = vector.extract_strided_slice %159 {offsets = [0, 32], sizes = [8, 32], strides = [1, 1]} : vector<8x128xf32> to vector<8x32xf32>
    %162 = vector.extract_strided_slice %159 {offsets = [0, 64], sizes = [8, 32], strides = [1, 1]} : vector<8x128xf32> to vector<8x32xf32>
    %163 = vector.extract_strided_slice %159 {offsets = [0, 96], sizes = [8, 32], strides = [1, 1]} : vector<8x128xf32> to vector<8x32xf32>
    %164 = arith.mulf %161, %141 : vector<8x32xf32>
    %165 = arith.mulf %160, %162 : vector<8x32xf32>
    %166 = arith.addf %164, %165 : vector<8x32xf32>
    %167 = math.tanh %166 : vector<8x32xf32>
    %168 = arith.mulf %163, %167 : vector<8x32xf32>
    %169 = arith.index_cast %147 : i32 to index
    %c0_36 = arith.constant 0 : index
    %170 = vector.load %arg11[%169, %c0_36] : memref<64x32xf32, #tpu.memory_space<vmem>>, vector<8x32xf32>
    tpu.vector_store %arg11[%169, %c0_36], %168 {strides = array<i32>} : memref<64x32xf32, #tpu.memory_space<vmem>>, vector<8x32xf32>,
    %c6_i32 = arith.constant 6 : i32
    %c8_i32_37 = arith.constant 8 : i32
    %171 = arith.muli %c6_i32, %c8_i32_37 : i32
    %172 = tpu.assume_multiple %171, 8 : i32
    %173 = arith.index_cast %172 : i32 to index
    %c0_38 = arith.constant 0 : index
    %174 = vector.load %arg10[%173, %c0_38] : memref<64x128xf32, #tpu.memory_space<vmem>>, vector<8x128xf32>
    %175 = arith.truncf %168 : vector<8x32xf32> to vector<8x32xbf16>
    %cst_39 = arith.constant dense<0.000000e+00> : vector<8x128xf32>
    %176 = tpu.matmul %175, %14, %cst_39 {dimension_numbers = #tpu.dot_dimension_numbers<[1], [0], [0], [1], [0, 0, 1, 1], [], []>} : vector<8x32xbf16>, vector<32x128xbf16>, vector<8x128xf32> -> vector<8x128xf32>
    %177 = arith.addf %174, %176 : vector<8x128xf32>
    %178 = vector.broadcast %8 : vector<1x128xf32> to vector<8x128xf32>
    %179 = arith.mulf %177, %178 : vector<8x128xf32>
    %180 = math.tanh %179 : vector<8x128xf32>
    %181 = vector.broadcast %8 : vector<1x128xf32> to vector<8x128xf32>
    %182 = arith.mulf %180, %181 : vector<8x128xf32>
    %183 = vector.broadcast %11 : vector<1x128xf32> to vector<8x128xf32>
    %184 = arith.addf %182, %183 : vector<8x128xf32>
    %185 = vector.extract_strided_slice %184 {offsets = [0, 0], sizes = [8, 32], strides = [1, 1]} : vector<8x128xf32> to vector<8x32xf32>
    %186 = vector.extract_strided_slice %184 {offsets = [0, 32], sizes = [8, 32], strides = [1, 1]} : vector<8x128xf32> to vector<8x32xf32>
    %187 = vector.extract_strided_slice %184 {offsets = [0, 64], sizes = [8, 32], strides = [1, 1]} : vector<8x128xf32> to vector<8x32xf32>
    %188 = vector.extract_strided_slice %184 {offsets = [0, 96], sizes = [8, 32], strides = [1, 1]} : vector<8x128xf32> to vector<8x32xf32>
    %189 = arith.mulf %186, %166 : vector<8x32xf32>
    %190 = arith.mulf %185, %187 : vector<8x32xf32>
    %191 = arith.addf %189, %190 : vector<8x32xf32>
    %192 = math.tanh %191 : vector<8x32xf32>
    %193 = arith.mulf %188, %192 : vector<8x32xf32>
    %194 = arith.index_cast %172 : i32 to index
    %c0_40 = arith.constant 0 : index
    %195 = vector.load %arg11[%194, %c0_40] : memref<64x32xf32, #tpu.memory_space<vmem>>, vector<8x32xf32>
    tpu.vector_store %arg11[%194, %c0_40], %193 {strides = array<i32>} : memref<64x32xf32, #tpu.memory_space<vmem>>, vector<8x32xf32>,
    %c7_i32 = arith.constant 7 : i32
    %c8_i32_41 = arith.constant 8 : i32
    %196 = arith.muli %c7_i32, %c8_i32_41 : i32
    %197 = tpu.assume_multiple %196, 8 : i32
    %198 = arith.index_cast %197 : i32 to index
    %c0_42 = arith.constant 0 : index
    %199 = vector.load %arg10[%198, %c0_42] : memref<64x128xf32, #tpu.memory_space<vmem>>, vector<8x128xf32>
    %200 = arith.truncf %193 : vector<8x32xf32> to vector<8x32xbf16>
    %cst_43 = arith.constant dense<0.000000e+00> : vector<8x128xf32>
    %201 = tpu.matmul %200, %14, %cst_43 {dimension_numbers = #tpu.dot_dimension_numbers<[1], [0], [0], [1], [0, 0, 1, 1], [], []>} : vector<8x32xbf16>, vector<32x128xbf16>, vector<8x128xf32> -> vector<8x128xf32>
    %202 = arith.addf %199, %201 : vector<8x128xf32>
    %203 = vector.broadcast %8 : vector<1x128xf32> to vector<8x128xf32>
    %204 = arith.mulf %202, %203 : vector<8x128xf32>
    %205 = math.tanh %204 : vector<8x128xf32>
    %206 = vector.broadcast %8 : vector<1x128xf32> to vector<8x128xf32>
    %207 = arith.mulf %205, %206 : vector<8x128xf32>
    %208 = vector.broadcast %11 : vector<1x128xf32> to vector<8x128xf32>
    %209 = arith.addf %207, %208 : vector<8x128xf32>
    %210 = vector.extract_strided_slice %209 {offsets = [0, 0], sizes = [8, 32], strides = [1, 1]} : vector<8x128xf32> to vector<8x32xf32>
    %211 = vector.extract_strided_slice %209 {offsets = [0, 32], sizes = [8, 32], strides = [1, 1]} : vector<8x128xf32> to vector<8x32xf32>
    %212 = vector.extract_strided_slice %209 {offsets = [0, 64], sizes = [8, 32], strides = [1, 1]} : vector<8x128xf32> to vector<8x32xf32>
    %213 = vector.extract_strided_slice %209 {offsets = [0, 96], sizes = [8, 32], strides = [1, 1]} : vector<8x128xf32> to vector<8x32xf32>
    %214 = arith.mulf %211, %191 : vector<8x32xf32>
    %215 = arith.mulf %210, %212 : vector<8x32xf32>
    %216 = arith.addf %214, %215 : vector<8x32xf32>
    %217 = math.tanh %216 : vector<8x32xf32>
    %218 = arith.mulf %213, %217 : vector<8x32xf32>
    %219 = arith.index_cast %197 : i32 to index
    %c0_44 = arith.constant 0 : index
    %220 = vector.load %arg11[%219, %c0_44] : memref<64x32xf32, #tpu.memory_space<vmem>>, vector<8x32xf32>
    tpu.vector_store %arg11[%219, %c0_44], %218 {strides = array<i32>} : memref<64x32xf32, #tpu.memory_space<vmem>>, vector<8x32xf32>,
    %c8_i32_45 = arith.constant 8 : i32
    %c0_46 = arith.constant 0 : index
    %c0_47 = arith.constant 0 : index
    %221 = vector.load %arg11[%c0_46, %c0_47] : memref<64x32xf32, #tpu.memory_space<vmem>>, vector<64x32xf32>
    %222 = arith.truncf %221 : vector<64x32xf32> to vector<64x32xbf16>
    %c0_48 = arith.constant 0 : index
    %c0_49 = arith.constant 0 : index
    %223 = vector.load %arg4[%c0_48, %c0_49] : memref<32x128xbf16, #tpu.memory_space<vmem>>, vector<32x128xbf16>
    %c0_50 = arith.constant 0 : index
    %c0_51 = arith.constant 0 : index
    %224 = vector.load %arg5[%c0_50, %c0_51] : memref<32x128xbf16, #tpu.memory_space<vmem>>, vector<32x128xbf16>
    %c0_52 = arith.constant 0 : index
    %c0_53 = arith.constant 0 : index
    %225 = vector.load %arg6[%c0_52, %c0_53] : memref<1x128xf32, #tpu.memory_space<vmem>>, vector<1x128xf32>
    %cst_54 = arith.constant dense<0.000000e+00> : vector<64x128xf32>
    %226 = tpu.matmul %222, %223, %cst_54 {dimension_numbers = #tpu.dot_dimension_numbers<[1], [0], [0], [1], [0, 0, 1, 1], [], []>} : vector<64x32xbf16>, vector<32x128xbf16>, vector<64x128xf32> -> vector<64x128xf32>
    %227 = vector.broadcast %225 : vector<1x128xf32> to vector<64x128xf32>
    %228 = arith.addf %226, %227 : vector<64x128xf32>
    %c0_55 = arith.constant 0 : index
    %c0_56 = arith.constant 0 : index
    %229 = vector.load %arg10[%c0_55, %c0_56] : memref<64x128xf32, #tpu.memory_space<vmem>>, vector<64x128xf32>
    tpu.vector_store %arg10[%c0_55, %c0_56], %228 {strides = array<i32>} : memref<64x128xf32, #tpu.memory_space<vmem>>, vector<64x128xf32>,
    %cst_57 = arith.constant 0.000000e+00 : f32
    %230 = vector.broadcast %cst_57 : f32 to vector<8x32xf32>
    %c0_i32_58 = arith.constant 0 : i32
    %c8_i32_59 = arith.constant 8 : i32
    %231 = arith.muli %c0_i32_58, %c8_i32_59 : i32
    %232 = tpu.assume_multiple %231, 8 : i32
    %233 = arith.index_cast %232 : i32 to index
    %c0_60 = arith.constant 0 : index
    %234 = vector.load %arg10[%233, %c0_60] : memref<64x128xf32, #tpu.memory_space<vmem>>, vector<8x128xf32>
    %235 = arith.truncf %230 : vector<8x32xf32> to vector<8x32xbf16>
    %cst_61 = arith.constant dense<0.000000e+00> : vector<8x128xf32>
    %236 = tpu.matmul %235, %224, %cst_61 {dimension_numbers = #tpu.dot_dimension_numbers<[1], [0], [0], [1], [0, 0, 1, 1], [], []>} : vector<8x32xbf16>, vector<32x128xbf16>, vector<8x128xf32> -> vector<8x128xf32>
    %237 = arith.addf %234, %236 : vector<8x128xf32>
    %238 = vector.broadcast %8 : vector<1x128xf32> to vector<8x128xf32>
    %239 = arith.mulf %237, %238 : vector<8x128xf32>
    %240 = math.tanh %239 : vector<8x128xf32>
    %241 = vector.broadcast %8 : vector<1x128xf32> to vector<8x128xf32>
    %242 = arith.mulf %240, %241 : vector<8x128xf32>
    %243 = vector.broadcast %11 : vector<1x128xf32> to vector<8x128xf32>
    %244 = arith.addf %242, %243 : vector<8x128xf32>
    %245 = vector.extract_strided_slice %244 {offsets = [0, 0], sizes = [8, 32], strides = [1, 1]} : vector<8x128xf32> to vector<8x32xf32>
    %246 = vector.extract_strided_slice %244 {offsets = [0, 32], sizes = [8, 32], strides = [1, 1]} : vector<8x128xf32> to vector<8x32xf32>
    %247 = vector.extract_strided_slice %244 {offsets = [0, 64], sizes = [8, 32], strides = [1, 1]} : vector<8x128xf32> to vector<8x32xf32>
    %248 = vector.extract_strided_slice %244 {offsets = [0, 96], sizes = [8, 32], strides = [1, 1]} : vector<8x128xf32> to vector<8x32xf32>
    %249 = arith.mulf %246, %230 : vector<8x32xf32>
    %250 = arith.mulf %245, %247 : vector<8x32xf32>
    %251 = arith.addf %249, %250 : vector<8x32xf32>
    %252 = math.tanh %251 : vector<8x32xf32>
    %253 = arith.mulf %248, %252 : vector<8x32xf32>
    %254 = arith.index_cast %232 : i32 to index
    %c0_62 = arith.constant 0 : index
    %255 = vector.load %arg11[%254, %c0_62] : memref<64x32xf32, #tpu.memory_space<vmem>>, vector<8x32xf32>
    tpu.vector_store %arg11[%254, %c0_62], %253 {strides = array<i32>} : memref<64x32xf32, #tpu.memory_space<vmem>>, vector<8x32xf32>,
    %c1_i32_63 = arith.constant 1 : i32
    %c8_i32_64 = arith.constant 8 : i32
    %256 = arith.muli %c1_i32_63, %c8_i32_64 : i32
    %257 = tpu.assume_multiple %256, 8 : i32
    %258 = arith.index_cast %257 : i32 to index
    %c0_65 = arith.constant 0 : index
    %259 = vector.load %arg10[%258, %c0_65] : memref<64x128xf32, #tpu.memory_space<vmem>>, vector<8x128xf32>
    %260 = arith.truncf %253 : vector<8x32xf32> to vector<8x32xbf16>
    %cst_66 = arith.constant dense<0.000000e+00> : vector<8x128xf32>
    %261 = tpu.matmul %260, %224, %cst_66 {dimension_numbers = #tpu.dot_dimension_numbers<[1], [0], [0], [1], [0, 0, 1, 1], [], []>} : vector<8x32xbf16>, vector<32x128xbf16>, vector<8x128xf32> -> vector<8x128xf32>
    %262 = arith.addf %259, %261 : vector<8x128xf32>
    %263 = vector.broadcast %8 : vector<1x128xf32> to vector<8x128xf32>
    %264 = arith.mulf %262, %263 : vector<8x128xf32>
    %265 = math.tanh %264 : vector<8x128xf32>
    %266 = vector.broadcast %8 : vector<1x128xf32> to vector<8x128xf32>
    %267 = arith.mulf %265, %266 : vector<8x128xf32>
    %268 = vector.broadcast %11 : vector<1x128xf32> to vector<8x128xf32>
    %269 = arith.addf %267, %268 : vector<8x128xf32>
    %270 = vector.extract_strided_slice %269 {offsets = [0, 0], sizes = [8, 32], strides = [1, 1]} : vector<8x128xf32> to vector<8x32xf32>
    %271 = vector.extract_strided_slice %269 {offsets = [0, 32], sizes = [8, 32], strides = [1, 1]} : vector<8x128xf32> to vector<8x32xf32>
    %272 = vector.extract_strided_slice %269 {offsets = [0, 64], sizes = [8, 32], strides = [1, 1]} : vector<8x128xf32> to vector<8x32xf32>
    %273 = vector.extract_strided_slice %269 {offsets = [0, 96], sizes = [8, 32], strides = [1, 1]} : vector<8x128xf32> to vector<8x32xf32>
    %274 = arith.mulf %271, %251 : vector<8x32xf32>
    %275 = arith.mulf %270, %272 : vector<8x32xf32>
    %276 = arith.addf %274, %275 : vector<8x32xf32>
    %277 = math.tanh %276 : vector<8x32xf32>
    %278 = arith.mulf %273, %277 : vector<8x32xf32>
    %279 = arith.index_cast %257 : i32 to index
    %c0_67 = arith.constant 0 : index
    %280 = vector.load %arg11[%279, %c0_67] : memref<64x32xf32, #tpu.memory_space<vmem>>, vector<8x32xf32>
    tpu.vector_store %arg11[%279, %c0_67], %278 {strides = array<i32>} : memref<64x32xf32, #tpu.memory_space<vmem>>, vector<8x32xf32>,
    %c2_i32_68 = arith.constant 2 : i32
    %c8_i32_69 = arith.constant 8 : i32
    %281 = arith.muli %c2_i32_68, %c8_i32_69 : i32
    %282 = tpu.assume_multiple %281, 8 : i32
    %283 = arith.index_cast %282 : i32 to index
    %c0_70 = arith.constant 0 : index
    %284 = vector.load %arg10[%283, %c0_70] : memref<64x128xf32, #tpu.memory_space<vmem>>, vector<8x128xf32>
    %285 = arith.truncf %278 : vector<8x32xf32> to vector<8x32xbf16>
    %cst_71 = arith.constant dense<0.000000e+00> : vector<8x128xf32>
    %286 = tpu.matmul %285, %224, %cst_71 {dimension_numbers = #tpu.dot_dimension_numbers<[1], [0], [0], [1], [0, 0, 1, 1], [], []>} : vector<8x32xbf16>, vector<32x128xbf16>, vector<8x128xf32> -> vector<8x128xf32>
    %287 = arith.addf %284, %286 : vector<8x128xf32>
    %288 = vector.broadcast %8 : vector<1x128xf32> to vector<8x128xf32>
    %289 = arith.mulf %287, %288 : vector<8x128xf32>
    %290 = math.tanh %289 : vector<8x128xf32>
    %291 = vector.broadcast %8 : vector<1x128xf32> to vector<8x128xf32>
    %292 = arith.mulf %290, %291 : vector<8x128xf32>
    %293 = vector.broadcast %11 : vector<1x128xf32> to vector<8x128xf32>
    %294 = arith.addf %292, %293 : vector<8x128xf32>
    %295 = vector.extract_strided_slice %294 {offsets = [0, 0], sizes = [8, 32], strides = [1, 1]} : vector<8x128xf32> to vector<8x32xf32>
    %296 = vector.extract_strided_slice %294 {offsets = [0, 32], sizes = [8, 32], strides = [1, 1]} : vector<8x128xf32> to vector<8x32xf32>
    %297 = vector.extract_strided_slice %294 {offsets = [0, 64], sizes = [8, 32], strides = [1, 1]} : vector<8x128xf32> to vector<8x32xf32>
    %298 = vector.extract_strided_slice %294 {offsets = [0, 96], sizes = [8, 32], strides = [1, 1]} : vector<8x128xf32> to vector<8x32xf32>
    %299 = arith.mulf %296, %276 : vector<8x32xf32>
    %300 = arith.mulf %295, %297 : vector<8x32xf32>
    %301 = arith.addf %299, %300 : vector<8x32xf32>
    %302 = math.tanh %301 : vector<8x32xf32>
    %303 = arith.mulf %298, %302 : vector<8x32xf32>
    %304 = arith.index_cast %282 : i32 to index
    %c0_72 = arith.constant 0 : index
    %305 = vector.load %arg11[%304, %c0_72] : memref<64x32xf32, #tpu.memory_space<vmem>>, vector<8x32xf32>
    tpu.vector_store %arg11[%304, %c0_72], %303 {strides = array<i32>} : memref<64x32xf32, #tpu.memory_space<vmem>>, vector<8x32xf32>,
    %c3_i32_73 = arith.constant 3 : i32
    %c8_i32_74 = arith.constant 8 : i32
    %306 = arith.muli %c3_i32_73, %c8_i32_74 : i32
    %307 = tpu.assume_multiple %306, 8 : i32
    %308 = arith.index_cast %307 : i32 to index
    %c0_75 = arith.constant 0 : index
    %309 = vector.load %arg10[%308, %c0_75] : memref<64x128xf32, #tpu.memory_space<vmem>>, vector<8x128xf32>
    %310 = arith.truncf %303 : vector<8x32xf32> to vector<8x32xbf16>
    %cst_76 = arith.constant dense<0.000000e+00> : vector<8x128xf32>
    %311 = tpu.matmul %310, %224, %cst_76 {dimension_numbers = #tpu.dot_dimension_numbers<[1], [0], [0], [1], [0, 0, 1, 1], [], []>} : vector<8x32xbf16>, vector<32x128xbf16>, vector<8x128xf32> -> vector<8x128xf32>
    %312 = arith.addf %309, %311 : vector<8x128xf32>
    %313 = vector.broadcast %8 : vector<1x128xf32> to vector<8x128xf32>
    %314 = arith.mulf %312, %313 : vector<8x128xf32>
    %315 = math.tanh %314 : vector<8x128xf32>
    %316 = vector.broadcast %8 : vector<1x128xf32> to vector<8x128xf32>
    %317 = arith.mulf %315, %316 : vector<8x128xf32>
    %318 = vector.broadcast %11 : vector<1x128xf32> to vector<8x128xf32>
    %319 = arith.addf %317, %318 : vector<8x128xf32>
    %320 = vector.extract_strided_slice %319 {offsets = [0, 0], sizes = [8, 32], strides = [1, 1]} : vector<8x128xf32> to vector<8x32xf32>
    %321 = vector.extract_strided_slice %319 {offsets = [0, 32], sizes = [8, 32], strides = [1, 1]} : vector<8x128xf32> to vector<8x32xf32>
    %322 = vector.extract_strided_slice %319 {offsets = [0, 64], sizes = [8, 32], strides = [1, 1]} : vector<8x128xf32> to vector<8x32xf32>
    %323 = vector.extract_strided_slice %319 {offsets = [0, 96], sizes = [8, 32], strides = [1, 1]} : vector<8x128xf32> to vector<8x32xf32>
    %324 = arith.mulf %321, %301 : vector<8x32xf32>
    %325 = arith.mulf %320, %322 : vector<8x32xf32>
    %326 = arith.addf %324, %325 : vector<8x32xf32>
    %327 = math.tanh %326 : vector<8x32xf32>
    %328 = arith.mulf %323, %327 : vector<8x32xf32>
    %329 = arith.index_cast %307 : i32 to index
    %c0_77 = arith.constant 0 : index
    %330 = vector.load %arg11[%329, %c0_77] : memref<64x32xf32, #tpu.memory_space<vmem>>, vector<8x32xf32>
    tpu.vector_store %arg11[%329, %c0_77], %328 {strides = array<i32>} : memref<64x32xf32, #tpu.memory_space<vmem>>, vector<8x32xf32>,
    %c4_i32_78 = arith.constant 4 : i32
    %c8_i32_79 = arith.constant 8 : i32
    %331 = arith.muli %c4_i32_78, %c8_i32_79 : i32
    %332 = tpu.assume_multiple %331, 8 : i32
    %333 = arith.index_cast %332 : i32 to index
    %c0_80 = arith.constant 0 : index
    %334 = vector.load %arg10[%333, %c0_80] : memref<64x128xf32, #tpu.memory_space<vmem>>, vector<8x128xf32>
    %335 = arith.truncf %328 : vector<8x32xf32> to vector<8x32xbf16>
    %cst_81 = arith.constant dense<0.000000e+00> : vector<8x128xf32>
    %336 = tpu.matmul %335, %224, %cst_81 {dimension_numbers = #tpu.dot_dimension_numbers<[1], [0], [0], [1], [0, 0, 1, 1], [], []>} : vector<8x32xbf16>, vector<32x128xbf16>, vector<8x128xf32> -> vector<8x128xf32>
    %337 = arith.addf %334, %336 : vector<8x128xf32>
    %338 = vector.broadcast %8 : vector<1x128xf32> to vector<8x128xf32>
    %339 = arith.mulf %337, %338 : vector<8x128xf32>
    %340 = math.tanh %339 : vector<8x128xf32>
    %341 = vector.broadcast %8 : vector<1x128xf32> to vector<8x128xf32>
    %342 = arith.mulf %340, %341 : vector<8x128xf32>
    %343 = vector.broadcast %11 : vector<1x128xf32> to vector<8x128xf32>
    %344 = arith.addf %342, %343 : vector<8x128xf32>
    %345 = vector.extract_strided_slice %344 {offsets = [0, 0], sizes = [8, 32], strides = [1, 1]} : vector<8x128xf32> to vector<8x32xf32>
    %346 = vector.extract_strided_slice %344 {offsets = [0, 32], sizes = [8, 32], strides = [1, 1]} : vector<8x128xf32> to vector<8x32xf32>
    %347 = vector.extract_strided_slice %344 {offsets = [0, 64], sizes = [8, 32], strides = [1, 1]} : vector<8x128xf32> to vector<8x32xf32>
    %348 = vector.extract_strided_slice %344 {offsets = [0, 96], sizes = [8, 32], strides = [1, 1]} : vector<8x128xf32> to vector<8x32xf32>
    %349 = arith.mulf %346, %326 : vector<8x32xf32>
    %350 = arith.mulf %345, %347 : vector<8x32xf32>
    %351 = arith.addf %349, %350 : vector<8x32xf32>
    %352 = math.tanh %351 : vector<8x32xf32>
    %353 = arith.mulf %348, %352 : vector<8x32xf32>
    %354 = arith.index_cast %332 : i32 to index
    %c0_82 = arith.constant 0 : index
    %355 = vector.load %arg11[%354, %c0_82] : memref<64x32xf32, #tpu.memory_space<vmem>>, vector<8x32xf32>
    tpu.vector_store %arg11[%354, %c0_82], %353 {strides = array<i32>} : memref<64x32xf32, #tpu.memory_space<vmem>>, vector<8x32xf32>,
    %c5_i32_83 = arith.constant 5 : i32
    %c8_i32_84 = arith.constant 8 : i32
    %356 = arith.muli %c5_i32_83, %c8_i32_84 : i32
    %357 = tpu.assume_multiple %356, 8 : i32
    %358 = arith.index_cast %357 : i32 to index
    %c0_85 = arith.constant 0 : index
    %359 = vector.load %arg10[%358, %c0_85] : memref<64x128xf32, #tpu.memory_space<vmem>>, vector<8x128xf32>
    %360 = arith.truncf %353 : vector<8x32xf32> to vector<8x32xbf16>
    %cst_86 = arith.constant dense<0.000000e+00> : vector<8x128xf32>
    %361 = tpu.matmul %360, %224, %cst_86 {dimension_numbers = #tpu.dot_dimension_numbers<[1], [0], [0], [1], [0, 0, 1, 1], [], []>} : vector<8x32xbf16>, vector<32x128xbf16>, vector<8x128xf32> -> vector<8x128xf32>
    %362 = arith.addf %359, %361 : vector<8x128xf32>
    %363 = vector.broadcast %8 : vector<1x128xf32> to vector<8x128xf32>
    %364 = arith.mulf %362, %363 : vector<8x128xf32>
    %365 = math.tanh %364 : vector<8x128xf32>
    %366 = vector.broadcast %8 : vector<1x128xf32> to vector<8x128xf32>
    %367 = arith.mulf %365, %366 : vector<8x128xf32>
    %368 = vector.broadcast %11 : vector<1x128xf32> to vector<8x128xf32>
    %369 = arith.addf %367, %368 : vector<8x128xf32>
    %370 = vector.extract_strided_slice %369 {offsets = [0, 0], sizes = [8, 32], strides = [1, 1]} : vector<8x128xf32> to vector<8x32xf32>
    %371 = vector.extract_strided_slice %369 {offsets = [0, 32], sizes = [8, 32], strides = [1, 1]} : vector<8x128xf32> to vector<8x32xf32>
    %372 = vector.extract_strided_slice %369 {offsets = [0, 64], sizes = [8, 32], strides = [1, 1]} : vector<8x128xf32> to vector<8x32xf32>
    %373 = vector.extract_strided_slice %369 {offsets = [0, 96], sizes = [8, 32], strides = [1, 1]} : vector<8x128xf32> to vector<8x32xf32>
    %374 = arith.mulf %371, %351 : vector<8x32xf32>
    %375 = arith.mulf %370, %372 : vector<8x32xf32>
    %376 = arith.addf %374, %375 : vector<8x32xf32>
    %377 = math.tanh %376 : vector<8x32xf32>
    %378 = arith.mulf %373, %377 : vector<8x32xf32>
    %379 = arith.index_cast %357 : i32 to index
    %c0_87 = arith.constant 0 : index
    %380 = vector.load %arg11[%379, %c0_87] : memref<64x32xf32, #tpu.memory_space<vmem>>, vector<8x32xf32>
    tpu.vector_store %arg11[%379, %c0_87], %378 {strides = array<i32>} : memref<64x32xf32, #tpu.memory_space<vmem>>, vector<8x32xf32>,
    %c6_i32_88 = arith.constant 6 : i32
    %c8_i32_89 = arith.constant 8 : i32
    %381 = arith.muli %c6_i32_88, %c8_i32_89 : i32
    %382 = tpu.assume_multiple %381, 8 : i32
    %383 = arith.index_cast %382 : i32 to index
    %c0_90 = arith.constant 0 : index
    %384 = vector.load %arg10[%383, %c0_90] : memref<64x128xf32, #tpu.memory_space<vmem>>, vector<8x128xf32>
    %385 = arith.truncf %378 : vector<8x32xf32> to vector<8x32xbf16>
    %cst_91 = arith.constant dense<0.000000e+00> : vector<8x128xf32>
    %386 = tpu.matmul %385, %224, %cst_91 {dimension_numbers = #tpu.dot_dimension_numbers<[1], [0], [0], [1], [0, 0, 1, 1], [], []>} : vector<8x32xbf16>, vector<32x128xbf16>, vector<8x128xf32> -> vector<8x128xf32>
    %387 = arith.addf %384, %386 : vector<8x128xf32>
    %388 = vector.broadcast %8 : vector<1x128xf32> to vector<8x128xf32>
    %389 = arith.mulf %387, %388 : vector<8x128xf32>
    %390 = math.tanh %389 : vector<8x128xf32>
    %391 = vector.broadcast %8 : vector<1x128xf32> to vector<8x128xf32>
    %392 = arith.mulf %390, %391 : vector<8x128xf32>
    %393 = vector.broadcast %11 : vector<1x128xf32> to vector<8x128xf32>
    %394 = arith.addf %392, %393 : vector<8x128xf32>
    %395 = vector.extract_strided_slice %394 {offsets = [0, 0], sizes = [8, 32], strides = [1, 1]} : vector<8x128xf32> to vector<8x32xf32>
    %396 = vector.extract_strided_slice %394 {offsets = [0, 32], sizes = [8, 32], strides = [1, 1]} : vector<8x128xf32> to vector<8x32xf32>
    %397 = vector.extract_strided_slice %394 {offsets = [0, 64], sizes = [8, 32], strides = [1, 1]} : vector<8x128xf32> to vector<8x32xf32>
    %398 = vector.extract_strided_slice %394 {offsets = [0, 96], sizes = [8, 32], strides = [1, 1]} : vector<8x128xf32> to vector<8x32xf32>
    %399 = arith.mulf %396, %376 : vector<8x32xf32>
    %400 = arith.mulf %395, %397 : vector<8x32xf32>
    %401 = arith.addf %399, %400 : vector<8x32xf32>
    %402 = math.tanh %401 : vector<8x32xf32>
    %403 = arith.mulf %398, %402 : vector<8x32xf32>
    %404 = arith.index_cast %382 : i32 to index
    %c0_92 = arith.constant 0 : index
    %405 = vector.load %arg11[%404, %c0_92] : memref<64x32xf32, #tpu.memory_space<vmem>>, vector<8x32xf32>
    tpu.vector_store %arg11[%404, %c0_92], %403 {strides = array<i32>} : memref<64x32xf32, #tpu.memory_space<vmem>>, vector<8x32xf32>,
    %c7_i32_93 = arith.constant 7 : i32
    %c8_i32_94 = arith.constant 8 : i32
    %406 = arith.muli %c7_i32_93, %c8_i32_94 : i32
    %407 = tpu.assume_multiple %406, 8 : i32
    %408 = arith.index_cast %407 : i32 to index
    %c0_95 = arith.constant 0 : index
    %409 = vector.load %arg10[%408, %c0_95] : memref<64x128xf32, #tpu.memory_space<vmem>>, vector<8x128xf32>
    %410 = arith.truncf %403 : vector<8x32xf32> to vector<8x32xbf16>
    %cst_96 = arith.constant dense<0.000000e+00> : vector<8x128xf32>
    %411 = tpu.matmul %410, %224, %cst_96 {dimension_numbers = #tpu.dot_dimension_numbers<[1], [0], [0], [1], [0, 0, 1, 1], [], []>} : vector<8x32xbf16>, vector<32x128xbf16>, vector<8x128xf32> -> vector<8x128xf32>
    %412 = arith.addf %409, %411 : vector<8x128xf32>
    %413 = vector.broadcast %8 : vector<1x128xf32> to vector<8x128xf32>
    %414 = arith.mulf %412, %413 : vector<8x128xf32>
    %415 = math.tanh %414 : vector<8x128xf32>
    %416 = vector.broadcast %8 : vector<1x128xf32> to vector<8x128xf32>
    %417 = arith.mulf %415, %416 : vector<8x128xf32>
    %418 = vector.broadcast %11 : vector<1x128xf32> to vector<8x128xf32>
    %419 = arith.addf %417, %418 : vector<8x128xf32>
    %420 = vector.extract_strided_slice %419 {offsets = [0, 0], sizes = [8, 32], strides = [1, 1]} : vector<8x128xf32> to vector<8x32xf32>
    %421 = vector.extract_strided_slice %419 {offsets = [0, 32], sizes = [8, 32], strides = [1, 1]} : vector<8x128xf32> to vector<8x32xf32>
    %422 = vector.extract_strided_slice %419 {offsets = [0, 64], sizes = [8, 32], strides = [1, 1]} : vector<8x128xf32> to vector<8x32xf32>
    %423 = vector.extract_strided_slice %419 {offsets = [0, 96], sizes = [8, 32], strides = [1, 1]} : vector<8x128xf32> to vector<8x32xf32>
    %424 = arith.mulf %421, %401 : vector<8x32xf32>
    %425 = arith.mulf %420, %422 : vector<8x32xf32>
    %426 = arith.addf %424, %425 : vector<8x32xf32>
    %427 = math.tanh %426 : vector<8x32xf32>
    %428 = arith.mulf %423, %427 : vector<8x32xf32>
    %429 = arith.index_cast %407 : i32 to index
    %c0_97 = arith.constant 0 : index
    %430 = vector.load %arg11[%429, %c0_97] : memref<64x32xf32, #tpu.memory_space<vmem>>, vector<8x32xf32>
    tpu.vector_store %arg11[%429, %c0_97], %428 {strides = array<i32>} : memref<64x32xf32, #tpu.memory_space<vmem>>, vector<8x32xf32>,
    %c8_i32_98 = arith.constant 8 : i32
    %c0_99 = arith.constant 0 : index
    %c0_100 = arith.constant 0 : index
    %431 = vector.load %arg11[%c0_99, %c0_100] : memref<64x32xf32, #tpu.memory_space<vmem>>, vector<64x32xf32>
    %c0_101 = arith.constant 0 : index
    %c0_102 = arith.constant 0 : index
    %432 = vector.load %arg7[%c0_101, %c0_102] : memref<32x1xf32, #tpu.memory_space<vmem>>, vector<32x1xf32>
    %cst_103 = arith.constant dense<0.000000e+00> : vector<64x1xf32>
    %433 = tpu.matmul %431, %432, %cst_103 {dimension_numbers = #tpu.dot_dimension_numbers<[1], [0], [0], [1], [0, 0, 1, 1], [], []>} : vector<64x32xf32>, vector<32x1xf32>, vector<64x1xf32> -> vector<64x1xf32>
    %c0_104 = arith.constant 0 : index
    %c0_105 = arith.constant 0 : index
    %434 = vector.load %arg8[%c0_104, %c0_105] : memref<1x1xf32, #tpu.memory_space<vmem>>, vector<1x1xf32>
    %435 = vector.broadcast %434 : vector<1x1xf32> to vector<64x1xf32>
    %436 = arith.addf %433, %435 : vector<64x1xf32>
    %c0_106 = arith.constant 0 : index
    %c0_107 = arith.constant 0 : index
    %437 = vector.load %arg9[%c0_106, %c0_107] : memref<64x1xf32, #tpu.memory_space<vmem>>, vector<64x1xf32>
    tpu.vector_store %arg9[%c0_106, %c0_107], %436 {strides = array<i32>} : memref<64x1xf32, #tpu.memory_space<vmem>>, vector<64x1xf32>,
    return
  }
}

</mosaic_0001>

<llo_original>
// kernel: lstm_model_forward.1
$region0: #{lstm_model_forward.1}
  #allocation0 [shape = 'u32[]', space=smem, size = 0x4, offset = 0x4, fixed_abs, tag = 'smem constant byte address 0x4 - core index']
  #allocation1 [shape = 'u32[144,128]{1,0:T(1,128)}', space=vmem, size = 0x12000, scoped, tag = 'internal scratch']
  #allocation2 [shape = 'f32[64,128]{1,0:T(8,128)}', space=vmem, size = 0x8000, scoped, tag = 'scratch operand']
  #allocation3 [shape = 'f32[64,32]{1,0:T(8,128)}', space=vmem, size = 0x8000, scoped, tag = 'scratch operand']
  #allocation4 [shape = 'f32[1,1]{1,0:T(1,128)S(1)}', space=vmem, size = 0x200, scoped, tag = 'scoped memory for lstm_model_forward.1']
  %s0 = inlined_call_operand.vmem [shape: bf16[64,16], index: 0, kind: input, shape index: {}]
  %s1 = inlined_call_operand.vmem [shape: bf16[16,128], index: 1, kind: input, shape index: {}]
  %s2 = inlined_call_operand.vmem [shape: bf16[32,128], index: 2, kind: input, shape index: {}]
  %s3 = inlined_call_operand.vmem [shape: f32[1,128], index: 3, kind: input, shape index: {}]
  %s4 = inlined_call_operand.vmem [shape: bf16[32,128], index: 4, kind: input, shape index: {}]
  %s5 = inlined_call_operand.vmem [shape: bf16[32,128], index: 5, kind: input, shape index: {}]
  %s6 = inlined_call_operand.vmem [shape: f32[1,128], index: 6, kind: input, shape index: {}]
  %s7 = inlined_call_operand.vmem [shape: f32[32,1], index: 7, kind: input, shape index: {}]
  %s8 = inlined_call_operand.<no memory space> [shape: f32[1,1], index: 8, kind: input, shape index: {}]
  %s9 = inlined_call_operand.vmem [shape: f32[64,1], index: 9, kind: output, shape index: {}]
  %s10 = sld [smem:[#allocation0]]
  $region46: #{lstm_model_forward.1} parent=0
    _
  %s12 = ssub.s32 1, %s10
  %s13 = scalar_select 0, %s12, %s10
  %v14 = vstv %s8
  %15 = vst [vmem:[#allocation4] sm:$0x1] %v14
  // Predicated region
  $region2: #{lstm_model_forward.1} parent=0 // pred_check
    _
  $region3: #{lstm_model_forward.1} parent=0 // pred_check_branch
    %17 = sbr.rel (0) target = $region5
  $region4: #{lstm_model_forward.1} parent=0 // pred_region
    _
  $region5: #{lstm_model_forward.1} parent=0 // pred_fallthru
    _
  // Predicated region
  $region6: #{lstm_model_forward.1} parent=0 // pred_check
    _
  $region7: #{lstm_model_forward.1} parent=0 // pred_check_branch
    %19 = sbr.rel (0) target = $region9
  $region8: #{lstm_model_forward.1} parent=0 // pred_region
    _
  $region9: #{lstm_model_forward.1} parent=0 // pred_fallthru
    _
  // Predicated region
  $region10: #{lstm_model_forward.1} parent=0 // pred_check
    _
  $region11: #{lstm_model_forward.1} parent=0 // pred_check_branch
    %21 = sbr.rel (0) target = $region13
  $region12: #{lstm_model_forward.1} parent=0 // pred_region
    _
  $region13: #{lstm_model_forward.1} parent=0 // pred_fallthru
    _
  // Predicated region
  $region14: #{lstm_model_forward.1} parent=0 // pred_check
    _
  $region15: #{lstm_model_forward.1} parent=0 // pred_check_branch
    %23 = sbr.rel (0) target = $region17
  $region16: #{lstm_model_forward.1} parent=0 // pred_region
    _
  $region17: #{lstm_model_forward.1} parent=0 // pred_fallthru
    _
  // Predicated region
  $region18: #{lstm_model_forward.1} parent=0 // pred_check
    _
  $region19: #{lstm_model_forward.1} parent=0 // pred_check_branch
    %25 = sbr.rel (0) target = $region21
  $region20: #{lstm_model_forward.1} parent=0 // pred_region
    _
  $region21: #{lstm_model_forward.1} parent=0 // pred_fallthru
    _
  // Predicated region
  $region22: #{lstm_model_forward.1} parent=0 // pred_check
    _
  $region23: #{lstm_model_forward.1} parent=0 // pred_check_branch
    %27 = sbr.rel (0) target = $region25
  $region24: #{lstm_model_forward.1} parent=0 // pred_region
    _
  $region25: #{lstm_model_forward.1} parent=0 // pred_fallthru
    _
  // Predicated region
  $region26: #{lstm_model_forward.1} parent=0 // pred_check
    _
  $region27: #{lstm_model_forward.1} parent=0 // pred_check_branch
    %29 = sbr.rel (0) target = $region29
  $region28: #{lstm_model_forward.1} parent=0 // pred_region
    _
  $region29: #{lstm_model_forward.1} parent=0 // pred_fallthru
    _
  // Predicated region
  $region30: #{lstm_model_forward.1} parent=0 // pred_check
    _
  $region31: #{lstm_model_forward.1} parent=0 // pred_check_branch
    %31 = sbr.rel (0) target = $region33
  $region32: #{lstm_model_forward.1} parent=0 // pred_region
    _
  $region33: #{lstm_model_forward.1} parent=0 // pred_fallthru
    _
  // Predicated region
  $region34: #{lstm_model_forward.1} parent=0 // pred_check
    _
  $region35: #{lstm_model_forward.1} parent=0 // pred_check_branch
    %33 = sbr.rel (0) target = $region37
  $region36: #{lstm_model_forward.1} parent=0 // pred_region
    _
  $region37: #{lstm_model_forward.1} parent=0 // pred_fallthru
    _
  %v35 = vlaneseq
  %v36 = vand.u32 %v35, 127
  %vm37 = vcmp.ge.s32.totalorder %v36, 64
  %vm38 = vcmp.lt.s32.totalorder %v36, 96
  %vm39 = vmand %vm37, %vm38
  %v40 = vsel %vm39, 1.0, 0.5
  %v41 = vsel %vm39, 0.0, 0.5
  %v42 = vld [vmem:[%s0] sm:$0xf]
  %v43 = vld [vmem:[%s0 + $0x4] sm:$0xf]
  %v44 = vld [vmem:[%s0 + $0x8] sm:$0xf]
  %v45 = vld [vmem:[%s0 + $0xc] sm:$0xf]
  %v46 = vld [vmem:[%s0 + $0x10] sm:$0xf]
  %v47 = vld [vmem:[%s0 + $0x14] sm:$0xf]
  %v48 = vld [vmem:[%s0 + $0x18] sm:$0xf]
  %v49 = vld [vmem:[%s0 + $0x1c] sm:$0xf]
  %v50 = vld [vmem:[%s1] sm:$0xf]
  %v51 = vld [vmem:[%s1 + $0x4] sm:$0xf]
  %v52 = vld [vmem:[%s2] sm:$0xf]
  %v53 = vld [vmem:[%s2 + $0x4] sm:$0xf]
  %v54 = vld [vmem:[%s2 + $0x8] sm:$0xf]
  %v55 = vld [vmem:[%s2 + $0xc] sm:$0xf]
  %v56 = vld [vmem:[%s3] sm:$0x1]
  %v58 = vlaneseq
  %v59 = vshrl.u32 %v58, 7
  %v60 = vsub.s32 0, %v59
  %v61 = vrot.slane %v56, %v60
  %v71 = vunpack.c.l.b16 %v42
  %v72 = vunpack.c.l.b16 %v43
  %v73 = vunpack.c.l.b16 %v44
  %v74 = vunpack.c.l.b16 %v45
  %v75 = vunpack.c.l.b16 %v46
  %v76 = vunpack.c.l.b16 %v47
  %v77 = vunpack.c.l.b16 %v48
  %v78 = vunpack.c.l.b16 %v49
  %v79 = vpack.c.b16 %v72, %v71
  %v80 = vpack.c.b16 %v74, %v73
  %v81 = vpack.c.b16 %v76, %v75
  %v82 = vpack.c.b16 %v78, %v77
  %v85 = vunpack.c.l.b16 %v50
  %v86 = vunpack.c.l.b16 %v51
  %v87 = vpack.c.b16 %v86, %v85
  %vm89 = vcmask 130048
  %v91 = vsel %vm89, %v79, 0
  %v94 = vsel %vm89, %v80, 0
  %v97 = vsel %vm89, %v81, 0
  %v100 = vsel %vm89, %v82, 0
  %102 = vmatprep.subr.bf16.mxu0 0
  %103 = vmatpush1.bf16.msra.mxu0 %v87
  %104 = vmatprep.subr.bf16.mxu0 0
  %105 = vmatpush1.bf16.msra.mxu0 0
  %106 = vmatprep.subr.bf16.mxu0 0
  %107 = vmatpush1.bf16.msra.mxu0 0
  %108 = vmatprep.subr.bf16.mxu0 0
  %109 = vmatpush1.bf16.msra.mxu0 0
  %110 = vmatprep.subr.bf16.mxu0 0
  %111 = vmatpush1.bf16.msra.mxu0 0
  %112 = vmatprep.subr.bf16.mxu0 0
  %113 = vmatpush1.bf16.msra.mxu0 0
  %114 = vmatprep.subr.bf16.mxu0 0
  %115 = vmatpush1.bf16.msra.mxu0 0
  %116 = vmatprep.subr.bf16.mxu0 0
  %117 = vmatpush1.bf16.msra.mxu0 0
  %118 = vmatprep.subr.bf16.mxu0 0
  %119 = vmatpush1.bf16.msra.mxu0 0
  %120 = vmatprep.subr.bf16.mxu0 0
  %121 = vmatpush1.bf16.msra.mxu0 0
  %122 = vmatprep.subr.bf16.mxu0 0
  %123 = vmatpush1.bf16.msra.mxu0 0
  %124 = vmatprep.subr.bf16.mxu0 0
  %125 = vmatpush1.bf16.msra.mxu0 0
  %126 = vmatprep.subr.bf16.mxu0 0
  %127 = vmatpush1.bf16.msra.mxu0 0
  %128 = vmatprep.subr.bf16.mxu0 0
  %129 = vmatpush1.bf16.msra.mxu0 0
  %130 = vmatprep.subr.bf16.mxu0 0
  %131 = vmatpush1.bf16.msra.mxu0 0
  %132 = vmatprep.subr.bf16.mxu0 0
  %133 = vmatpush1.bf16.msra.mxu0 0
  %134 = vmatprep.mubr.bf16.mxu0 0
  %135 = vmatmul.mubr.bf16.gmra.mrb[0].mxu0 %v91
  %v136 = vpop.f32.mrb[0].mxu0
  %v137 = vadd.f32 %v61, %v136
  %v138 = vpop.f32.mrb[0].mxu0
  %v139 = vpop.f32.mrb[0].mxu0
  %v140 = vadd.f32 %v61, %v139
  %v141 = vpop.f32.mrb[0].mxu0
  %142 = vmatprep.mubr.bf16.mxu0 0
  %143 = vmatmul.mubr.bf16.gmra.mrb[0].mxu0 %v94
  %v144 = vpop.f32.mrb[0].mxu0
  %v145 = vadd.f32 %v61, %v144
  %v146 = vpop.f32.mrb[0].mxu0
  %v147 = vpop.f32.mrb[0].mxu0
  %v148 = vadd.f32 %v61, %v147
  %v149 = vpop.f32.mrb[0].mxu0
  %150 = vmatprep.mubr.bf16.mxu0 0
  %151 = vmatmul.mubr.bf16.gmra.mrb[0].mxu0 %v97
  %v152 = vpop.f32.mrb[0].mxu0
  %v153 = vadd.f32 %v61, %v152
  %v154 = vpop.f32.mrb[0].mxu0
  %v155 = vpop.f32.mrb[0].mxu0
  %v156 = vadd.f32 %v61, %v155
  %v157 = vpop.f32.mrb[0].mxu0
  %158 = vmatprep.mubr.bf16.mxu0 0
  %159 = vmatmul.mubr.bf16.gmra.mrb[0].mxu0 %v100
  %v160 = vpop.f32.mrb[0].mxu0
  %v161 = vadd.f32 %v61, %v160
  %v162 = vpop.f32.mrb[0].mxu0
  %v163 = vpop.f32.mrb[0].mxu0
  %v164 = vadd.f32 %v61, %v163
  %v165 = vpop.f32.mrb[0].mxu0
  %166 = vdwg.mxu0
  %167 = vst [vmem:[#allocation2] sm:$0xff] %v137
  %168 = vst [vmem:[#allocation2 + $0x8] sm:$0xff] %v140
  %169 = vst [vmem:[#allocation2 + $0x10] sm:$0xff] %v145
  %170 = vst [vmem:[#allocation2 + $0x18] sm:$0xff] %v148
  %171 = vst [vmem:[#allocation2 + $0x20] sm:$0xff] %v153
  %172 = vst [vmem:[#allocation2 + $0x28] sm:$0xff] %v156
  %173 = vst [vmem:[#allocation2 + $0x30] sm:$0xff] %v161
  %174 = vst [vmem:[#allocation2 + $0x38] sm:$0xff] %v164
  %v175 = vld [vmem:[#allocation2] sm:$0xff]
  %v180 = vunpack.c.l.b16 %v52
  %v181 = vunpack.c.l.b16 %v53
  %v182 = vunpack.c.l.b16 %v54
  %v183 = vunpack.c.l.b16 %v55
  %v184 = vpack.c.b16 %v181, %v180
  %v185 = vpack.c.b16 %v183, %v182
  %vm188 = vcmask 261120
  %v190 = vsel %vm188, 0, 0
  %192 = vmatprep.subr.bf16.mxu0 0
  %193 = vmatpush1.bf16.msra.mxu0 %v184
  %194 = vmatprep.subr.bf16.mxu0 0
  %195 = vmatpush1.bf16.msra.mxu0 %v185
  %196 = vmatprep.subr.bf16.mxu0 0
  %197 = vmatpush1.bf16.msra.mxu0 0
  %198 = vmatprep.subr.bf16.mxu0 0
  %199 = vmatpush1.bf16.msra.mxu0 0
  %200 = vmatprep.subr.bf16.mxu0 0
  %201 = vmatpush1.bf16.msra.mxu0 0
  %202 = vmatprep.subr.bf16.mxu0 0
  %203 = vmatpush1.bf16.msra.mxu0 0
  %204 = vmatprep.subr.bf16.mxu0 0
  %205 = vmatpush1.bf16.msra.mxu0 0
  %206 = vmatprep.subr.bf16.mxu0 0
  %207 = vmatpush1.bf16.msra.mxu0 0
  %208 = vmatprep.subr.bf16.mxu0 0
  %209 = vmatpush1.bf16.msra.mxu0 0
  %210 = vmatprep.subr.bf16.mxu0 0
  %211 = vmatpush1.bf16.msra.mxu0 0
  %212 = vmatprep.subr.bf16.mxu0 0
  %213 = vmatpush1.bf16.msra.mxu0 0
  %214 = vmatprep.subr.bf16.mxu0 0
  %215 = vmatpush1.bf16.msra.mxu0 0
  %216 = vmatprep.subr.bf16.mxu0 0
  %217 = vmatpush1.bf16.msra.mxu0 0
  %218 = vmatprep.subr.bf16.mxu0 0
  %219 = vmatpush1.bf16.msra.mxu0 0
  %220 = vmatprep.subr.bf16.mxu0 0
  %221 = vmatpush1.bf16.msra.mxu0 0
  %222 = vmatprep.subr.bf16.mxu0 0
  %223 = vmatpush1.bf16.msra.mxu0 0
  %224 = vmatprep.mubr.bf16.mxu0 0
  %225 = vmatmul.mubr.bf16.gmra.mrb[0].mxu0 %v190
  %v226 = vpop.f32.mrb[0].mxu0
  %v227 = vadd.f32 0.0, %v226
  %v228 = vpop.f32.mrb[0].mxu0
  %v229 = vpop.f32.mrb[0].mxu0
  %v230 = vpop.f32.mrb[0].mxu0
  %231 = vdwg.mxu0
  %v232 = vadd.f32 %v175, %v227
  %v233 = vmul.f32 %v232, %v40
  %v234 = vtanh.pop %v233
  %v235 = vmul.f32 %v234, %v40
  %v236 = vadd.f32 %v235, %v41
  %v237 = vmul.f32 %v236, 0.0
  %239 = vrot.lane.b32.xlu0 %v236, 64
  %v240 = vpop.permute.xlu0 %239
  %v242 = vmul.f32 %v236, %v240
  %244 = vrot.lane.b32.xlu0 %v242, 32
  %v245 = vpop.permute.xlu0 %244
  %v247 = vadd.f32 %v237, %v245
  %v248 = vtanh.pop %v247
  %250 = vrot.lane.b32.xlu0 %v248, 64
  %v251 = vpop.permute.xlu0 %250
  %v253 = vmul.f32 %v236, %v251
  %255 = vrot.lane.b32.xlu0 %v253, 32
  %v256 = vpop.permute.xlu0 %255
  %258 = vst.msk [vmem:[#allocation3] sm:$0xff] %vm188, %v256
  %s259 = scalar_lea.vmem [#allocation2], 8
  %v260 = vld [vmem:[%s259] sm:$0xff]
  %v261 = vpack.c.bf16 %v253, %v253
  %263 = vrot.lane.b32.xlu0 %v261, 32
  %v264 = vpop.permute.xlu0 %263
  %v266 = vsel %vm188, %v264, 0
  %268 = vmatprep.subr.bf16.mxu0 0
  %269 = vmatpush1.bf16.msra.mxu0 %v184
  %270 = vmatprep.subr.bf16.mxu0 0
  %271 = vmatpush1.bf16.msra.mxu0 %v185
  %272 = vmatprep.subr.bf16.mxu0 0
  %273 = vmatpush1.bf16.msra.mxu0 0
  %274 = vmatprep.subr.bf16.mxu0 0
  %275 = vmatpush1.bf16.msra.mxu0 0
  %276 = vmatprep.subr.bf16.mxu0 0
  %277 = vmatpush1.bf16.msra.mxu0 0
  %278 = vmatprep.subr.bf16.mxu0 0
  %279 = vmatpush1.bf16.msra.mxu0 0
  %280 = vmatprep.subr.bf16.mxu0 0
  %281 = vmatpush1.bf16.msra.mxu0 0
  %282 = vmatprep.subr.bf16.mxu0 0
  %283 = vmatpush1.bf16.msra.mxu0 0
  %284 = vmatprep.subr.bf16.mxu0 0
  %285 = vmatpush1.bf16.msra.mxu0 0
  %286 = vmatprep.subr.bf16.mxu0 0
  %287 = vmatpush1.bf16.msra.mxu0 0
  %288 = vmatprep.subr.bf16.mxu0 0
  %289 = vmatpush1.bf16.msra.mxu0 0
  %290 = vmatprep.subr.bf16.mxu0 0
  %291 = vmatpush1.bf16.msra.mxu0 0
  %292 = vmatprep.subr.bf16.mxu0 0
  %293 = vmatpush1.bf16.msra.mxu0 0
  %294 = vmatprep.subr.bf16.mxu0 0
  %295 = vmatpush1.bf16.msra.mxu0 0
  %296 = vmatprep.subr.bf16.mxu0 0
  %297 = vmatpush1.bf16.msra.mxu0 0
  %298 = vmatprep.subr.bf16.mxu0 0
  %299 = vmatpush1.bf16.msra.mxu0 0
  %300 = vmatprep.mubr.bf16.mxu0 0
  %301 = vmatmul.mubr.bf16.gmra.mrb[0].mxu0 %v266
  %v302 = vpop.f32.mrb[0].mxu0
  %v303 = vadd.f32 0.0, %v302
  %v304 = vpop.f32.mrb[0].mxu0
  %v305 = vpop.f32.mrb[0].mxu0
  %v306 = vpop.f32.mrb[0].mxu0
  %307 = vdwg.mxu0
  %v308 = vadd.f32 %v260, %v303
  %v309 = vmul.f32 %v308, %v40
  %v310 = vtanh.pop %v309
  %v311 = vmul.f32 %v310, %v40
  %v312 = vadd.f32 %v311, %v41
  %v313 = vmul.f32 %v312, %v247
  %315 = vrot.lane.b32.xlu0 %v312, 64
  %v316 = vpop.permute.xlu0 %315
  %v318 = vmul.f32 %v312, %v316
  %320 = vrot.lane.b32.xlu0 %v318, 32
  %v321 = vpop.permute.xlu0 %320
  %v323 = vadd.f32 %v313, %v321
  %v324 = vtanh.pop %v323
  %326 = vrot.lane.b32.xlu0 %v324, 64
  %v327 = vpop.permute.xlu0 %326
  %v329 = vmul.f32 %v312, %v327
  %331 = vrot.lane.b32.xlu0 %v329, 32
  %v332 = vpop.permute.xlu0 %331
  %s334 = scalar_lea.vmem [#allocation3], 8
  %335 = vst.msk [vmem:[%s334] sm:$0xff] %vm188, %v332
  %s336 = scalar_lea.vmem [#allocation2], 16
  %v337 = vld [vmem:[%s336] sm:$0xff]
  %v338 = vpack.c.bf16 %v329, %v329
  %340 = vrot.lane.b32.xlu0 %v338, 32
  %v341 = vpop.permute.xlu0 %340
  %v343 = vsel %vm188, %v341, 0
  %345 = vmatprep.subr.bf16.mxu0 0
  %346 = vmatpush1.bf16.msra.mxu0 %v184
  %347 = vmatprep.subr.bf16.mxu0 0
  %348 = vmatpush1.bf16.msra.mxu0 %v185
  %349 = vmatprep.subr.bf16.mxu0 0
  %350 = vmatpush1.bf16.msra.mxu0 0
  %351 = vmatprep.subr.bf16.mxu0 0
  %352 = vmatpush1.bf16.msra.mxu0 0
  %353 = vmatprep.subr.bf16.mxu0 0
  %354 = vmatpush1.bf16.msra.mxu0 0
  %355 = vmatprep.subr.bf16.mxu0 0
  %356 = vmatpush1.bf16.msra.mxu0 0
  %357 = vmatprep.subr.bf16.mxu0 0
  %358 = vmatpush1.bf16.msra.mxu0 0
  %359 = vmatprep.subr.bf16.mxu0 0
  %360 = vmatpush1.bf16.msra.mxu0 0
  %361 = vmatprep.subr.bf16.mxu0 0
  %362 = vmatpush1.bf16.msra.mxu0 0
  %363 = vmatprep.subr.bf16.mxu0 0
  %364 = vmatpush1.bf16.msra.mxu0 0
  %365 = vmatprep.subr.bf16.mxu0 0
  %366 = vmatpush1.bf16.msra.mxu0 0
  %367 = vmatprep.subr.bf16.mxu0 0
  %368 = vmatpush1.bf16.msra.mxu0 0
  %369 = vmatprep.subr.bf16.mxu0 0
  %370 = vmatpush1.bf16.msra.mxu0 0
  %371 = vmatprep.subr.bf16.mxu0 0
  %372 = vmatpush1.bf16.msra.mxu0 0
  %373 = vmatprep.subr.bf16.mxu0 0
  %374 = vmatpush1.bf16.msra.mxu0 0
  %375 = vmatprep.subr.bf16.mxu0 0
  %376 = vmatpush1.bf16.msra.mxu0 0
  %377 = vmatprep.mubr.bf16.mxu0 0
  %378 = vmatmul.mubr.bf16.gmra.mrb[0].mxu0 %v343
  %v379 = vpop.f32.mrb[0].mxu0
  %v380 = vadd.f32 0.0, %v379
  %v381 = vpop.f32.mrb[0].mxu0
  %v382 = vpop.f32.mrb[0].mxu0
  %v383 = vpop.f32.mrb[0].mxu0
  %384 = vdwg.mxu0
  %v385 = vadd.f32 %v337, %v380
  %v386 = vmul.f32 %v385, %v40
  %v387 = vtanh.pop %v386
  %v388 = vmul.f32 %v387, %v40
  %v389 = vadd.f32 %v388, %v41
  %v390 = vmul.f32 %v389, %v323
  %392 = vrot.lane.b32.xlu0 %v389, 64
  %v393 = vpop.permute.xlu0 %392
  %v395 = vmul.f32 %v389, %v393
  %397 = vrot.lane.b32.xlu0 %v395, 32
  %v398 = vpop.permute.xlu0 %397
  %v400 = vadd.f32 %v390, %v398
  %v401 = vtanh.pop %v400
  %403 = vrot.lane.b32.xlu0 %v401, 64
  %v404 = vpop.permute.xlu0 %403
  %v406 = vmul.f32 %v389, %v404
  %408 = vrot.lane.b32.xlu0 %v406, 32
  %v409 = vpop.permute.xlu0 %408
  %s411 = scalar_lea.vmem [#allocation3], 16
  %412 = vst.msk [vmem:[%s411] sm:$0xff] %vm188, %v409
  %s413 = scalar_lea.vmem [#allocation2], 24
  %v414 = vld [vmem:[%s413] sm:$0xff]
  %v415 = vpack.c.bf16 %v406, %v406
  %417 = vrot.lane.b32.xlu0 %v415, 32
  %v418 = vpop.permute.xlu0 %417
  %v420 = vsel %vm188, %v418, 0
  %422 = vmatprep.subr.bf16.mxu0 0
  %423 = vmatpush1.bf16.msra.mxu0 %v184
  %424 = vmatprep.subr.bf16.mxu0 0
  %425 = vmatpush1.bf16.msra.mxu0 %v185
  %426 = vmatprep.subr.bf16.mxu0 0
  %427 = vmatpush1.bf16.msra.mxu0 0
  %428 = vmatprep.subr.bf16.mxu0 0
  %429 = vmatpush1.bf16.msra.mxu0 0
  %430 = vmatprep.subr.bf16.mxu0 0
  %431 = vmatpush1.bf16.msra.mxu0 0
  %432 = vmatprep.subr.bf16.mxu0 0
  %433 = vmatpush1.bf16.msra.mxu0 0
  %434 = vmatprep.subr.bf16.mxu0 0
  %435 = vmatpush1.bf16.msra.mxu0 0
  %436 = vmatprep.subr.bf16.mxu0 0
  %437 = vmatpush1.bf16.msra.mxu0 0
  %438 = vmatprep.subr.bf16.mxu0 0
  %439 = vmatpush1.bf16.msra.mxu0 0
  %440 = vmatprep.subr.bf16.mxu0 0
  %441 = vmatpush1.bf16.msra.mxu0 0
  %442 = vmatprep.subr.bf16.mxu0 0
  %443 = vmatpush1.bf16.msra.mxu0 0
  %444 = vmatprep.subr.bf16.mxu0 0
  %445 = vmatpush1.bf16.msra.mxu0 0
  %446 = vmatprep.subr.bf16.mxu0 0
  %447 = vmatpush1.bf16.msra.mxu0 0
  %448 = vmatprep.subr.bf16.mxu0 0
  %449 = vmatpush1.bf16.msra.mxu0 0
  %450 = vmatprep.subr.bf16.mxu0 0
  %451 = vmatpush1.bf16.msra.mxu0 0
  %452 = vmatprep.subr.bf16.mxu0 0
  %453 = vmatpush1.bf16.msra.mxu0 0
  %454 = vmatprep.mubr.bf16.mxu0 0
  %455 = vmatmul.mubr.bf16.gmra.mrb[0].mxu0 %v420
  %v456 = vpop.f32.mrb[0].mxu0
  %v457 = vadd.f32 0.0, %v456
  %v458 = vpop.f32.mrb[0].mxu0
  %v459 = vpop.f32.mrb[0].mxu0
  %v460 = vpop.f32.mrb[0].mxu0
  %461 = vdwg.mxu0
  %v462 = vadd.f32 %v414, %v457
  %v463 = vmul.f32 %v462, %v40
  %v464 = vtanh.pop %v463
  %v465 = vmul.f32 %v464, %v40
  %v466 = vadd.f32 %v465, %v41
  %v467 = vmul.f32 %v466, %v400
  %469 = vrot.lane.b32.xlu0 %v466, 64
  %v470 = vpop.permute.xlu0 %469
  %v472 = vmul.f32 %v466, %v470
  %474 = vrot.lane.b32.xlu0 %v472, 32
  %v475 = vpop.permute.xlu0 %474
  %v477 = vadd.f32 %v467, %v475
  %v478 = vtanh.pop %v477
  %480 = vrot.lane.b32.xlu0 %v478, 64
  %v481 = vpop.permute.xlu0 %480
  %v483 = vmul.f32 %v466, %v481
  %485 = vrot.lane.b32.xlu0 %v483, 32
  %v486 = vpop.permute.xlu0 %485
  %s488 = scalar_lea.vmem [#allocation3], 24
  %489 = vst.msk [vmem:[%s488] sm:$0xff] %vm188, %v486
  %s490 = scalar_lea.vmem [#allocation2], 32
  %v491 = vld [vmem:[%s490] sm:$0xff]
  %v492 = vpack.c.bf16 %v483, %v483
  %494 = vrot.lane.b32.xlu0 %v492, 32
  %v495 = vpop.permute.xlu0 %494
  %v497 = vsel %vm188, %v495, 0
  %499 = vmatprep.subr.bf16.mxu0 0
  %500 = vmatpush1.bf16.msra.mxu0 %v184
  %501 = vmatprep.subr.bf16.mxu0 0
  %502 = vmatpush1.bf16.msra.mxu0 %v185
  %503 = vmatprep.subr.bf16.mxu0 0
  %504 = vmatpush1.bf16.msra.mxu0 0
  %505 = vmatprep.subr.bf16.mxu0 0
  %506 = vmatpush1.bf16.msra.mxu0 0
  %507 = vmatprep.subr.bf16.mxu0 0
  %508 = vmatpush1.bf16.msra.mxu0 0
  %509 = vmatprep.subr.bf16.mxu0 0
  %510 = vmatpush1.bf16.msra.mxu0 0
  %511 = vmatprep.subr.bf16.mxu0 0
  %512 = vmatpush1.bf16.msra.mxu0 0
  %513 = vmatprep.subr.bf16.mxu0 0
  %514 = vmatpush1.bf16.msra.mxu0 0
  %515 = vmatprep.subr.bf16.mxu0 0
  %516 = vmatpush1.bf16.msra.mxu0 0
  %517 = vmatprep.subr.bf16.mxu0 0
  %518 = vmatpush1.bf16.msra.mxu0 0
  %519 = vmatprep.subr.bf16.mxu0 0
  %520 = vmatpush1.bf16.msra.mxu0 0
  %521 = vmatprep.subr.bf16.mxu0 0
  %522 = vmatpush1.bf16.msra.mxu0 0
  %523 = vmatprep.subr.bf16.mxu0 0
  %524 = vmatpush1.bf16.msra.mxu0 0
  %525 = vmatprep.subr.bf16.mxu0 0
  %526 = vmatpush1.bf16.msra.mxu0 0
  %527 = vmatprep.subr.bf16.mxu0 0
  %528 = vmatpush1.bf16.msra.mxu0 0
  %529 = vmatprep.subr.bf16.mxu0 0
  %530 = vmatpush1.bf16.msra.mxu0 0
  %531 = vmatprep.mubr.bf16.mxu0 0
  %532 = vmatmul.mubr.bf16.gmra.mrb[0].mxu0 %v497
  %v533 = vpop.f32.mrb[0].mxu0
  %v534 = vadd.f32 0.0, %v533
  %v535 = vpop.f32.mrb[0].mxu0
  %v536 = vpop.f32.mrb[0].mxu0
  %v537 = vpop.f32.mrb[0].mxu0
  %538 = vdwg.mxu0
  %v539 = vadd.f32 %v491, %v534
  %v540 = vmul.f32 %v539, %v40
  %v541 = vtanh.pop %v540
  %v542 = vmul.f32 %v541, %v40
  %v543 = vadd.f32 %v542, %v41
  %v544 = vmul.f32 %v543, %v477
  %546 = vrot.lane.b32.xlu0 %v543, 64
  %v547 = vpop.permute.xlu0 %546
  %v549 = vmul.f32 %v543, %v547
  %551 = vrot.lane.b32.xlu0 %v549, 32
  %v552 = vpop.permute.xlu0 %551
  %v554 = vadd.f32 %v544, %v552
  %v555 = vtanh.pop %v554
  %557 = vrot.lane.b32.xlu0 %v555, 64
  %v558 = vpop.permute.xlu0 %557
  %v560 = vmul.f32 %v543, %v558
  %562 = vrot.lane.b32.xlu0 %v560, 32
  %v563 = vpop.permute.xlu0 %562
  %s565 = scalar_lea.vmem [#allocation3], 32
  %566 = vst.msk [vmem:[%s565] sm:$0xff] %vm188, %v563
  %s567 = scalar_lea.vmem [#allocation2], 40
  %v568 = vld [vmem:[%s567] sm:$0xff]
  %v569 = vpack.c.bf16 %v560, %v560
  %571 = vrot.lane.b32.xlu0 %v569, 32
  %v572 = vpop.permute.xlu0 %571
  %v574 = vsel %vm188, %v572, 0
  %576 = vmatprep.subr.bf16.mxu0 0
  %577 = vmatpush1.bf16.msra.mxu0 %v184
  %578 = vmatprep.subr.bf16.mxu0 0
  %579 = vmatpush1.bf16.msra.mxu0 %v185
  %580 = vmatprep.subr.bf16.mxu0 0
  %581 = vmatpush1.bf16.msra.mxu0 0
  %582 = vmatprep.subr.bf16.mxu0 0
  %583 = vmatpush1.bf16.msra.mxu0 0
  %584 = vmatprep.subr.bf16.mxu0 0
  %585 = vmatpush1.bf16.msra.mxu0 0
  %586 = vmatprep.subr.bf16.mxu0 0
  %587 = vmatpush1.bf16.msra.mxu0 0
  %588 = vmatprep.subr.bf16.mxu0 0
  %589 = vmatpush1.bf16.msra.mxu0 0
  %590 = vmatprep.subr.bf16.mxu0 0
  %591 = vmatpush1.bf16.msra.mxu0 0
  %592 = vmatprep.subr.bf16.mxu0 0
  %593 = vmatpush1.bf16.msra.mxu0 0
  %594 = vmatprep.subr.bf16.mxu0 0
  %595 = vmatpush1.bf16.msra.mxu0 0
  %596 = vmatprep.subr.bf16.mxu0 0
  %597 = vmatpush1.bf16.msra.mxu0 0
  %598 = vmatprep.subr.bf16.mxu0 0
  %599 = vmatpush1.bf16.msra.mxu0 0
  %600 = vmatprep.subr.bf16.mxu0 0
  %601 = vmatpush1.bf16.msra.mxu0 0
  %602 = vmatprep.subr.bf16.mxu0 0
  %603 = vmatpush1.bf16.msra.mxu0 0
  %604 = vmatprep.subr.bf16.mxu0 0
  %605 = vmatpush1.bf16.msra.mxu0 0
  %606 = vmatprep.subr.bf16.mxu0 0
  %607 = vmatpush1.bf16.msra.mxu0 0
  %608 = vmatprep.mubr.bf16.mxu0 0
  %609 = vmatmul.mubr.bf16.gmra.mrb[0].mxu0 %v574
  %v610 = vpop.f32.mrb[0].mxu0
  %v611 = vadd.f32 0.0, %v610
  %v612 = vpop.f32.mrb[0].mxu0
  %v613 = vpop.f32.mrb[0].mxu0
  %v614 = vpop.f32.mrb[0].mxu0
  %615 = vdwg.mxu0
  %v616 = vadd.f32 %v568, %v611
  %v617 = vmul.f32 %v616, %v40
  %v618 = vtanh.pop %v617
  %v619 = vmul.f32 %v618, %v40
  %v620 = vadd.f32 %v619, %v41
  %v621 = vmul.f32 %v620, %v554
  %623 = vrot.lane.b32.xlu0 %v620, 64
  %v624 = vpop.permute.xlu0 %623
  %v626 = vmul.f32 %v620, %v624
  %628 = vrot.lane.b32.xlu0 %v626, 32
  %v629 = vpop.permute.xlu0 %628
  %v631 = vadd.f32 %v621, %v629
  %v632 = vtanh.pop %v631
  %634 = vrot.lane.b32.xlu0 %v632, 64
  %v635 = vpop.permute.xlu0 %634
  %v637 = vmul.f32 %v620, %v635
  %639 = vrot.lane.b32.xlu0 %v637, 32
  %v640 = vpop.permute.xlu0 %639
  %s642 = scalar_lea.vmem [#allocation3], 40
  %643 = vst.msk [vmem:[%s642] sm:$0xff] %vm188, %v640
  %s644 = scalar_lea.vmem [#allocation2], 48
  %v645 = vld [vmem:[%s644] sm:$0xff]
  %v646 = vpack.c.bf16 %v637, %v637
  %648 = vrot.lane.b32.xlu0 %v646, 32
  %v649 = vpop.permute.xlu0 %648
  %v651 = vsel %vm188, %v649, 0
  %653 = vmatprep.subr.bf16.mxu0 0
  %654 = vmatpush1.bf16.msra.mxu0 %v184
  %655 = vmatprep.subr.bf16.mxu0 0
  %656 = vmatpush1.bf16.msra.mxu0 %v185
  %657 = vmatprep.subr.bf16.mxu0 0
  %658 = vmatpush1.bf16.msra.mxu0 0
  %659 = vmatprep.subr.bf16.mxu0 0
  %660 = vmatpush1.bf16.msra.mxu0 0
  %661 = vmatprep.subr.bf16.mxu0 0
  %662 = vmatpush1.bf16.msra.mxu0 0
  %663 = vmatprep.subr.bf16.mxu0 0
  %664 = vmatpush1.bf16.msra.mxu0 0
  %665 = vmatprep.subr.bf16.mxu0 0
  %666 = vmatpush1.bf16.msra.mxu0 0
  %667 = vmatprep.subr.bf16.mxu0 0
  %668 = vmatpush1.bf16.msra.mxu0 0
  %669 = vmatprep.subr.bf16.mxu0 0
  %670 = vmatpush1.bf16.msra.mxu0 0
  %671 = vmatprep.subr.bf16.mxu0 0
  %672 = vmatpush1.bf16.msra.mxu0 0
  %673 = vmatprep.subr.bf16.mxu0 0
  %674 = vmatpush1.bf16.msra.mxu0 0
  %675 = vmatprep.subr.bf16.mxu0 0
  %676 = vmatpush1.bf16.msra.mxu0 0
  %677 = vmatprep.subr.bf16.mxu0 0
  %678 = vmatpush1.bf16.msra.mxu0 0
  %679 = vmatprep.subr.bf16.mxu0 0
  %680 = vmatpush1.bf16.msra.mxu0 0
  %681 = vmatprep.subr.bf16.mxu0 0
  %682 = vmatpush1.bf16.msra.mxu0 0
  %683 = vmatprep.subr.bf16.mxu0 0
  %684 = vmatpush1.bf16.msra.mxu0 0
  %685 = vmatprep.mubr.bf16.mxu0 0
  %686 = vmatmul.mubr.bf16.gmra.mrb[0].mxu0 %v651
  %v687 = vpop.f32.mrb[0].mxu0
  %v688 = vadd.f32 0.0, %v687
  %v689 = vpop.f32.mrb[0].mxu0
  %v690 = vpop.f32.mrb[0].mxu0
  %v691 = vpop.f32.mrb[0].mxu0
  %692 = vdwg.mxu0
  %v693 = vadd.f32 %v645, %v688
  %v694 = vmul.f32 %v693, %v40
  %v695 = vtanh.pop %v694
  %v696 = vmul.f32 %v695, %v40
  %v697 = vadd.f32 %v696, %v41
  %v698 = vmul.f32 %v697, %v631
  %700 = vrot.lane.b32.xlu0 %v697, 64
  %v701 = vpop.permute.xlu0 %700
  %v703 = vmul.f32 %v697, %v701
  %705 = vrot.lane.b32.xlu0 %v703, 32
  %v706 = vpop.permute.xlu0 %705
  %v708 = vadd.f32 %v698, %v706
  %v709 = vtanh.pop %v708
  %711 = vrot.lane.b32.xlu0 %v709, 64
  %v712 = vpop.permute.xlu0 %711
  %v714 = vmul.f32 %v697, %v712
  %716 = vrot.lane.b32.xlu0 %v714, 32
  %v717 = vpop.permute.xlu0 %716
  %s719 = scalar_lea.vmem [#allocation3], 48
  %720 = vst.msk [vmem:[%s719] sm:$0xff] %vm188, %v717
  %s721 = scalar_lea.vmem [#allocation2], 56
  %v722 = vld [vmem:[%s721] sm:$0xff]
  %v723 = vpack.c.bf16 %v714, %v714
  %725 = vrot.lane.b32.xlu0 %v723, 32
  %v726 = vpop.permute.xlu0 %725
  %v728 = vsel %vm188, %v726, 0
  %730 = vmatprep.subr.bf16.mxu0 0
  %731 = vmatpush1.bf16.msra.mxu0 %v184
  %732 = vmatprep.subr.bf16.mxu0 0
  %733 = vmatpush1.bf16.msra.mxu0 %v185
  %734 = vmatprep.subr.bf16.mxu0 0
  %735 = vmatpush1.bf16.msra.mxu0 0
  %736 = vmatprep.subr.bf16.mxu0 0
  %737 = vmatpush1.bf16.msra.mxu0 0
  %738 = vmatprep.subr.bf16.mxu0 0
  %739 = vmatpush1.bf16.msra.mxu0 0
  %740 = vmatprep.subr.bf16.mxu0 0
  %741 = vmatpush1.bf16.msra.mxu0 0
  %742 = vmatprep.subr.bf16.mxu0 0
  %743 = vmatpush1.bf16.msra.mxu0 0
  %744 = vmatprep.subr.bf16.mxu0 0
  %745 = vmatpush1.bf16.msra.mxu0 0
  %746 = vmatprep.subr.bf16.mxu0 0
  %747 = vmatpush1.bf16.msra.mxu0 0
  %748 = vmatprep.subr.bf16.mxu0 0
  %749 = vmatpush1.bf16.msra.mxu0 0
  %750 = vmatprep.subr.bf16.mxu0 0
  %751 = vmatpush1.bf16.msra.mxu0 0
  %752 = vmatprep.subr.bf16.mxu0 0
  %753 = vmatpush1.bf16.msra.mxu0 0
  %754 = vmatprep.subr.bf16.mxu0 0
  %755 = vmatpush1.bf16.msra.mxu0 0
  %756 = vmatprep.subr.bf16.mxu0 0
  %757 = vmatpush1.bf16.msra.mxu0 0
  %758 = vmatprep.subr.bf16.mxu0 0
  %759 = vmatpush1.bf16.msra.mxu0 0
  %760 = vmatprep.subr.bf16.mxu0 0
  %761 = vmatpush1.bf16.msra.mxu0 0
  %762 = vmatprep.mubr.bf16.mxu0 0
  %763 = vmatmul.mubr.bf16.gmra.mrb[0].mxu0 %v728
  %v764 = vpop.f32.mrb[0].mxu0
  %v765 = vadd.f32 0.0, %v764
  %v766 = vpop.f32.mrb[0].mxu0
  %v767 = vpop.f32.mrb[0].mxu0
  %v768 = vpop.f32.mrb[0].mxu0
  %769 = vdwg.mxu0
  %v770 = vadd.f32 %v722, %v765
  %v771 = vmul.f32 %v770, %v40
  %v772 = vtanh.pop %v771
  %v773 = vmul.f32 %v772, %v40
  %v774 = vadd.f32 %v773, %v41
  %v775 = vmul.f32 %v774, %v708
  %777 = vrot.lane.b32.xlu0 %v774, 64
  %v778 = vpop.permute.xlu0 %777
  %v780 = vmul.f32 %v774, %v778
  %782 = vrot.lane.b32.xlu0 %v780, 32
  %v783 = vpop.permute.xlu0 %782
  %v785 = vadd.f32 %v775, %v783
  %v786 = vtanh.pop %v785
  %788 = vrot.lane.b32.xlu0 %v786, 64
  %v789 = vpop.permute.xlu0 %788
  %v791 = vmul.f32 %v774, %v789
  %793 = vrot.lane.b32.xlu0 %v791, 32
  %v794 = vpop.permute.xlu0 %793
  %s796 = scalar_lea.vmem [#allocation3], 56
  %797 = vst.msk [vmem:[%s796] sm:$0xff] %vm188, %v794
  %v798 = vld [vmem:[#allocation3] sm:$0xff]
  %v799 = vld [vmem:[#allocation3 + $0x8] sm:$0xff]
  %v800 = vld [vmem:[#allocation3 + $0x10] sm:$0xff]
  %v801 = vld [vmem:[#allocation3 + $0x18] sm:$0xff]
  %v802 = vld [vmem:[#allocation3 + $0x20] sm:$0xff]
  %v803 = vld [vmem:[#allocation3 + $0x28] sm:$0xff]
  %v804 = vld [vmem:[#allocation3 + $0x30] sm:$0xff]
  %v805 = vld [vmem:[#allocation3 + $0x38] sm:$0xff]
  %v806 = vpack.c.bf16 %v799, %v798
  %v807 = vpack.c.bf16 %v801, %v800
  %v808 = vpack.c.bf16 %v803, %v802
  %v809 = vpack.c.bf16 %v805, %v804
  %v810 = vld [vmem:[%s4] sm:$0xf]
  %v811 = vld [vmem:[%s4 + $0x4] sm:$0xf]
  %v812 = vld [vmem:[%s4 + $0x8] sm:$0xf]
  %v813 = vld [vmem:[%s4 + $0xc] sm:$0xf]
  %v814 = vld [vmem:[%s5] sm:$0xf]
  %v815 = vld [vmem:[%s5 + $0x4] sm:$0xf]
  %v816 = vld [vmem:[%s5 + $0x8] sm:$0xf]
  %v817 = vld [vmem:[%s5 + $0xc] sm:$0xf]
  %v818 = vld [vmem:[%s6] sm:$0x1]
  %v820 = vlaneseq
  %v821 = vshrl.u32 %v820, 7
  %v822 = vsub.s32 0, %v821
  %v823 = vrot.slane %v818, %v822
  %v829 = vunpack.c.l.b16 %v810
  %v830 = vunpack.c.l.b16 %v811
  %v831 = vunpack.c.l.b16 %v812
  %v832 = vunpack.c.l.b16 %v813
  %v833 = vpack.c.b16 %v830, %v829
  %v834 = vpack.c.b16 %v832, %v831
  %v838 = vsel %vm188, %v806, 0
  %v841 = vsel %vm188, %v807, 0
  %v844 = vsel %vm188, %v808, 0
  %v847 = vsel %vm188, %v809, 0
  %849 = vmatprep.subr.bf16.mxu0 0
  %850 = vmatpush1.bf16.msra.mxu0 %v833
  %851 = vmatprep.subr.bf16.mxu0 0
  %852 = vmatpush1.bf16.msra.mxu0 %v834
  %853 = vmatprep.subr.bf16.mxu0 0
  %854 = vmatpush1.bf16.msra.mxu0 0
  %855 = vmatprep.subr.bf16.mxu0 0
  %856 = vmatpush1.bf16.msra.mxu0 0
  %857 = vmatprep.subr.bf16.mxu0 0
  %858 = vmatpush1.bf16.msra.mxu0 0
  %859 = vmatprep.subr.bf16.mxu0 0
  %860 = vmatpush1.bf16.msra.mxu0 0
  %861 = vmatprep.subr.bf16.mxu0 0
  %862 = vmatpush1.bf16.msra.mxu0 0
  %863 = vmatprep.subr.bf16.mxu0 0
  %864 = vmatpush1.bf16.msra.mxu0 0
  %865 = vmatprep.subr.bf16.mxu0 0
  %866 = vmatpush1.bf16.msra.mxu0 0
  %867 = vmatprep.subr.bf16.mxu0 0
  %868 = vmatpush1.bf16.msra.mxu0 0
  %869 = vmatprep.subr.bf16.mxu0 0
  %870 = vmatpush1.bf16.msra.mxu0 0
  %871 = vmatprep.subr.bf16.mxu0 0
  %872 = vmatpush1.bf16.msra.mxu0 0
  %873 = vmatprep.subr.bf16.mxu0 0
  %874 = vmatpush1.bf16.msra.mxu0 0
  %875 = vmatprep.subr.bf16.mxu0 0
  %876 = vmatpush1.bf16.msra.mxu0 0
  %877 = vmatprep.subr.bf16.mxu0 0
  %878 = vmatpush1.bf16.msra.mxu0 0
  %879 = vmatprep.subr.bf16.mxu0 0
  %880 = vmatpush1.bf16.msra.mxu0 0
  %881 = vmatprep.mubr.bf16.mxu0 0
  %882 = vmatmul.mubr.bf16.gmra.mrb[0].mxu0 %v838
  %v883 = vpop.f32.mrb[0].mxu0
  %v884 = vadd.f32 %v823, %v883
  %v885 = vpop.f32.mrb[0].mxu0
  %v886 = vpop.f32.mrb[0].mxu0
  %v887 = vadd.f32 %v823, %v886
  %v888 = vpop.f32.mrb[0].mxu0
  %889 = vmatprep.mubr.bf16.mxu0 0
  %890 = vmatmul.mubr.bf16.gmra.mrb[0].mxu0 %v841
  %v891 = vpop.f32.mrb[0].mxu0
  %v892 = vadd.f32 %v823, %v891
  %v893 = vpop.f32.mrb[0].mxu0
  %v894 = vpop.f32.mrb[0].mxu0
  %v895 = vadd.f32 %v823, %v894
  %v896 = vpop.f32.mrb[0].mxu0
  %897 = vmatprep.mubr.bf16.mxu0 0
  %898 = vmatmul.mubr.bf16.gmra.mrb[0].mxu0 %v844
  %v899 = vpop.f32.mrb[0].mxu0
  %v900 = vadd.f32 %v823, %v899
  %v901 = vpop.f32.mrb[0].mxu0
  %v902 = vpop.f32.mrb[0].mxu0
  %v903 = vadd.f32 %v823, %v902
  %v904 = vpop.f32.mrb[0].mxu0
  %905 = vmatprep.mubr.bf16.mxu0 0
  %906 = vmatmul.mubr.bf16.gmra.mrb[0].mxu0 %v847
  %v907 = vpop.f32.mrb[0].mxu0
  %v908 = vadd.f32 %v823, %v907
  %v909 = vpop.f32.mrb[0].mxu0
  %v910 = vpop.f32.mrb[0].mxu0
  %v911 = vadd.f32 %v823, %v910
  %v912 = vpop.f32.mrb[0].mxu0
  %913 = vdwg.mxu0
  %914 = vst [vmem:[#allocation2] sm:$0xff] %v884
  %915 = vst [vmem:[#allocation2 + $0x8] sm:$0xff] %v887
  %916 = vst [vmem:[#allocation2 + $0x10] sm:$0xff] %v892
  %917 = vst [vmem:[#allocation2 + $0x18] sm:$0xff] %v895
  %918 = vst [vmem:[#allocation2 + $0x20] sm:$0xff] %v900
  %919 = vst [vmem:[#allocation2 + $0x28] sm:$0xff] %v903
  %920 = vst [vmem:[#allocation2 + $0x30] sm:$0xff] %v908
  %921 = vst [vmem:[#allocation2 + $0x38] sm:$0xff] %v911
  %v922 = vld [vmem:[#allocation2] sm:$0xff]
  %v927 = vunpack.c.l.b16 %v814
  %v928 = vunpack.c.l.b16 %v815
  %v929 = vunpack.c.l.b16 %v816
  %v930 = vunpack.c.l.b16 %v817
  %v931 = vpack.c.b16 %v928, %v927
  %v932 = vpack.c.b16 %v930, %v929
  %935 = vmatprep.subr.bf16.mxu0 0
  %936 = vmatpush1.bf16.msra.mxu0 %v931
  %937 = vmatprep.subr.bf16.mxu0 0
  %938 = vmatpush1.bf16.msra.mxu0 %v932
  %939 = vmatprep.subr.bf16.mxu0 0
  %940 = vmatpush1.bf16.msra.mxu0 0
  %941 = vmatprep.subr.bf16.mxu0 0
  %942 = vmatpush1.bf16.msra.mxu0 0
  %943 = vmatprep.subr.bf16.mxu0 0
  %944 = vmatpush1.bf16.msra.mxu0 0
  %945 = vmatprep.subr.bf16.mxu0 0
  %946 = vmatpush1.bf16.msra.mxu0 0
  %947 = vmatprep.subr.bf16.mxu0 0
  %948 = vmatpush1.bf16.msra.mxu0 0
  %949 = vmatprep.subr.bf16.mxu0 0
  %950 = vmatpush1.bf16.msra.mxu0 0
  %951 = vmatprep.subr.bf16.mxu0 0
  %952 = vmatpush1.bf16.msra.mxu0 0
  %953 = vmatprep.subr.bf16.mxu0 0
  %954 = vmatpush1.bf16.msra.mxu0 0
  %955 = vmatprep.subr.bf16.mxu0 0
  %956 = vmatpush1.bf16.msra.mxu0 0
  %957 = vmatprep.subr.bf16.mxu0 0
  %958 = vmatpush1.bf16.msra.mxu0 0
  %959 = vmatprep.subr.bf16.mxu0 0
  %960 = vmatpush1.bf16.msra.mxu0 0
  %961 = vmatprep.subr.bf16.mxu0 0
  %962 = vmatpush1.bf16.msra.mxu0 0
  %963 = vmatprep.subr.bf16.mxu0 0
  %964 = vmatpush1.bf16.msra.mxu0 0
  %965 = vmatprep.subr.bf16.mxu0 0
  %966 = vmatpush1.bf16.msra.mxu0 0
  %967 = vmatprep.mubr.bf16.mxu0 0
  %968 = vmatmul.mubr.bf16.gmra.mrb[0].mxu0 %v190
  %v969 = vpop.f32.mrb[0].mxu0
  %v970 = vadd.f32 0.0, %v969
  %v971 = vpop.f32.mrb[0].mxu0
  %v972 = vpop.f32.mrb[0].mxu0
  %v973 = vpop.f32.mrb[0].mxu0
  %974 = vdwg.mxu0
  %v975 = vadd.f32 %v922, %v970
  %v976 = vmul.f32 %v975, %v40
  %v977 = vtanh.pop %v976
  %v978 = vmul.f32 %v977, %v40
  %v979 = vadd.f32 %v978, %v41
  %v980 = vmul.f32 %v979, 0.0
  %982 = vrot.lane.b32.xlu0 %v979, 64
  %v983 = vpop.permute.xlu0 %982
  %v985 = vmul.f32 %v979, %v983
  %987 = vrot.lane.b32.xlu0 %v985, 32
  %v988 = vpop.permute.xlu0 %987
  %v990 = vadd.f32 %v980, %v988
  %v991 = vtanh.pop %v990
  %993 = vrot.lane.b32.xlu0 %v991, 64
  %v994 = vpop.permute.xlu0 %993
  %v996 = vmul.f32 %v979, %v994
  %998 = vrot.lane.b32.xlu0 %v996, 32
  %v999 = vpop.permute.xlu0 %998
  %1001 = vst.msk [vmem:[#allocation3] sm:$0xff] %vm188, %v999
  %v1002 = vld [vmem:[%s259] sm:$0xff]
  %v1003 = vpack.c.bf16 %v996, %v996
  %1005 = vrot.lane.b32.xlu0 %v1003, 32
  %v1006 = vpop.permute.xlu0 %1005
  %v1008 = vsel %vm188, %v1006, 0
  %1010 = vmatprep.subr.bf16.mxu0 0
  %1011 = vmatpush1.bf16.msra.mxu0 %v931
  %1012 = vmatprep.subr.bf16.mxu0 0
  %1013 = vmatpush1.bf16.msra.mxu0 %v932
  %1014 = vmatprep.subr.bf16.mxu0 0
  %1015 = vmatpush1.bf16.msra.mxu0 0
  %1016 = vmatprep.subr.bf16.mxu0 0
  %1017 = vmatpush1.bf16.msra.mxu0 0
  %1018 = vmatprep.subr.bf16.mxu0 0
  %1019 = vmatpush1.bf16.msra.mxu0 0
  %1020 = vmatprep.subr.bf16.mxu0 0
  %1021 = vmatpush1.bf16.msra.mxu0 0
  %1022 = vmatprep.subr.bf16.mxu0 0
  %1023 = vmatpush1.bf16.msra.mxu0 0
  %1024 = vmatprep.subr.bf16.mxu0 0
  %1025 = vmatpush1.bf16.msra.mxu0 0
  %1026 = vmatprep.subr.bf16.mxu0 0
  %1027 = vmatpush1.bf16.msra.mxu0 0
  %1028 = vmatprep.subr.bf16.mxu0 0
  %1029 = vmatpush1.bf16.msra.mxu0 0
  %1030 = vmatprep.subr.bf16.mxu0 0
  %1031 = vmatpush1.bf16.msra.mxu0 0
  %1032 = vmatprep.subr.bf16.mxu0 0
  %1033 = vmatpush1.bf16.msra.mxu0 0
  %1034 = vmatprep.subr.bf16.mxu0 0
  %1035 = vmatpush1.bf16.msra.mxu0 0
  %1036 = vmatprep.subr.bf16.mxu0 0
  %1037 = vmatpush1.bf16.msra.mxu0 0
  %1038 = vmatprep.subr.bf16.mxu0 0
  %1039 = vmatpush1.bf16.msra.mxu0 0
  %1040 = vmatprep.subr.bf16.mxu0 0
  %1041 = vmatpush1.bf16.msra.mxu0 0
  %1042 = vmatprep.mubr.bf16.mxu0 0
  %1043 = vmatmul.mubr.bf16.gmra.mrb[0].mxu0 %v1008
  %v1044 = vpop.f32.mrb[0].mxu0
  %v1045 = vadd.f32 0.0, %v1044
  %v1046 = vpop.f32.mrb[0].mxu0
  %v1047 = vpop.f32.mrb[0].mxu0
  %v1048 = vpop.f32.mrb[0].mxu0
  %1049 = vdwg.mxu0
  %v1050 = vadd.f32 %v1002, %v1045
  %v1051 = vmul.f32 %v1050, %v40
  %v1052 = vtanh.pop %v1051
  %v1053 = vmul.f32 %v1052, %v40
  %v1054 = vadd.f32 %v1053, %v41
  %v1055 = vmul.f32 %v1054, %v990
  %1057 = vrot.lane.b32.xlu0 %v1054, 64
  %v1058 = vpop.permute.xlu0 %1057
  %v1060 = vmul.f32 %v1054, %v1058
  %1062 = vrot.lane.b32.xlu0 %v1060, 32
  %v1063 = vpop.permute.xlu0 %1062
  %v1065 = vadd.f32 %v1055, %v1063
  %v1066 = vtanh.pop %v1065
  %1068 = vrot.lane.b32.xlu0 %v1066, 64
  %v1069 = vpop.permute.xlu0 %1068
  %v1071 = vmul.f32 %v1054, %v1069
  %1073 = vrot.lane.b32.xlu0 %v1071, 32
  %v1074 = vpop.permute.xlu0 %1073
  %1076 = vst.msk [vmem:[%s334] sm:$0xff] %vm188, %v1074
  %v1077 = vld [vmem:[%s336] sm:$0xff]
  %v1078 = vpack.c.bf16 %v1071, %v1071
  %1080 = vrot.lane.b32.xlu0 %v1078, 32
  %v1081 = vpop.permute.xlu0 %1080
  %v1083 = vsel %vm188, %v1081, 0
  %1085 = vmatprep.subr.bf16.mxu0 0
  %1086 = vmatpush1.bf16.msra.mxu0 %v931
  %1087 = vmatprep.subr.bf16.mxu0 0
  %1088 = vmatpush1.bf16.msra.mxu0 %v932
  %1089 = vmatprep.subr.bf16.mxu0 0
  %1090 = vmatpush1.bf16.msra.mxu0 0
  %1091 = vmatprep.subr.bf16.mxu0 0
  %1092 = vmatpush1.bf16.msra.mxu0 0
  %1093 = vmatprep.subr.bf16.mxu0 0
  %1094 = vmatpush1.bf16.msra.mxu0 0
  %1095 = vmatprep.subr.bf16.mxu0 0
  %1096 = vmatpush1.bf16.msra.mxu0 0
  %1097 = vmatprep.subr.bf16.mxu0 0
  %1098 = vmatpush1.bf16.msra.mxu0 0
  %1099 = vmatprep.subr.bf16.mxu0 0
  %1100 = vmatpush1.bf16.msra.mxu0 0
  %1101 = vmatprep.subr.bf16.mxu0 0
  %1102 = vmatpush1.bf16.msra.mxu0 0
  %1103 = vmatprep.subr.bf16.mxu0 0
  %1104 = vmatpush1.bf16.msra.mxu0 0
  %1105 = vmatprep.subr.bf16.mxu0 0
  %1106 = vmatpush1.bf16.msra.mxu0 0
  %1107 = vmatprep.subr.bf16.mxu0 0
  %1108 = vmatpush1.bf16.msra.mxu0 0
  %1109 = vmatprep.subr.bf16.mxu0 0
  %1110 = vmatpush1.bf16.msra.mxu0 0
  %1111 = vmatprep.subr.bf16.mxu0 0
  %1112 = vmatpush1.bf16.msra.mxu0 0
  %1113 = vmatprep.subr.bf16.mxu0 0
  %1114 = vmatpush1.bf16.msra.mxu0 0
  %1115 = vmatprep.subr.bf16.mxu0 0
  %1116 = vmatpush1.bf16.msra.mxu0 0
  %1117 = vmatprep.mubr.bf16.mxu0 0
  %1118 = vmatmul.mubr.bf16.gmra.mrb[0].mxu0 %v1083
  %v1119 = vpop.f32.mrb[0].mxu0
  %v1120 = vadd.f32 0.0, %v1119
  %v1121 = vpop.f32.mrb[0].mxu0
  %v1122 = vpop.f32.mrb[0].mxu0
  %v1123 = vpop.f32.mrb[0].mxu0
  %1124 = vdwg.mxu0
  %v1125 = vadd.f32 %v1077, %v1120
  %v1126 = vmul.f32 %v1125, %v40
  %v1127 = vtanh.pop %v1126
  %v1128 = vmul.f32 %v1127, %v40
  %v1129 = vadd.f32 %v1128, %v41
  %v1130 = vmul.f32 %v1129, %v1065
  %1132 = vrot.lane.b32.xlu0 %v1129, 64
  %v1133 = vpop.permute.xlu0 %1132
  %v1135 = vmul.f32 %v1129, %v1133
  %1137 = vrot.lane.b32.xlu0 %v1135, 32
  %v1138 = vpop.permute.xlu0 %1137
  %v1140 = vadd.f32 %v1130, %v1138
  %v1141 = vtanh.pop %v1140
  %1143 = vrot.lane.b32.xlu0 %v1141, 64
  %v1144 = vpop.permute.xlu0 %1143
  %v1146 = vmul.f32 %v1129, %v1144
  %1148 = vrot.lane.b32.xlu0 %v1146, 32
  %v1149 = vpop.permute.xlu0 %1148
  %1151 = vst.msk [vmem:[%s411] sm:$0xff] %vm188, %v1149
  %v1152 = vld [vmem:[%s413] sm:$0xff]
  %v1153 = vpack.c.bf16 %v1146, %v1146
  %1155 = vrot.lane.b32.xlu0 %v1153, 32
  %v1156 = vpop.permute.xlu0 %1155
  %v1158 = vsel %vm188, %v1156, 0
  %1160 = vmatprep.subr.bf16.mxu0 0
  %1161 = vmatpush1.bf16.msra.mxu0 %v931
  %1162 = vmatprep.subr.bf16.mxu0 0
  %1163 = vmatpush1.bf16.msra.mxu0 %v932
  %1164 = vmatprep.subr.bf16.mxu0 0
  %1165 = vmatpush1.bf16.msra.mxu0 0
  %1166 = vmatprep.subr.bf16.mxu0 0
  %1167 = vmatpush1.bf16.msra.mxu0 0
  %1168 = vmatprep.subr.bf16.mxu0 0
  %1169 = vmatpush1.bf16.msra.mxu0 0
  %1170 = vmatprep.subr.bf16.mxu0 0
  %1171 = vmatpush1.bf16.msra.mxu0 0
  %1172 = vmatprep.subr.bf16.mxu0 0
  %1173 = vmatpush1.bf16.msra.mxu0 0
  %1174 = vmatprep.subr.bf16.mxu0 0
  %1175 = vmatpush1.bf16.msra.mxu0 0
  %1176 = vmatprep.subr.bf16.mxu0 0
  %1177 = vmatpush1.bf16.msra.mxu0 0
  %1178 = vmatprep.subr.bf16.mxu0 0
  %1179 = vmatpush1.bf16.msra.mxu0 0
  %1180 = vmatprep.subr.bf16.mxu0 0
  %1181 = vmatpush1.bf16.msra.mxu0 0
  %1182 = vmatprep.subr.bf16.mxu0 0
  %1183 = vmatpush1.bf16.msra.mxu0 0
  %1184 = vmatprep.subr.bf16.mxu0 0
  %1185 = vmatpush1.bf16.msra.mxu0 0
  %1186 = vmatprep.subr.bf16.mxu0 0
  %1187 = vmatpush1.bf16.msra.mxu0 0
  %1188 = vmatprep.subr.bf16.mxu0 0
  %1189 = vmatpush1.bf16.msra.mxu0 0
  %1190 = vmatprep.subr.bf16.mxu0 0
  %1191 = vmatpush1.bf16.msra.mxu0 0
  %1192 = vmatprep.mubr.bf16.mxu0 0
  %1193 = vmatmul.mubr.bf16.gmra.mrb[0].mxu0 %v1158
  %v1194 = vpop.f32.mrb[0].mxu0
  %v1195 = vadd.f32 0.0, %v1194
  %v1196 = vpop.f32.mrb[0].mxu0
  %v1197 = vpop.f32.mrb[0].mxu0
  %v1198 = vpop.f32.mrb[0].mxu0
  %1199 = vdwg.mxu0
  %v1200 = vadd.f32 %v1152, %v1195
  %v1201 = vmul.f32 %v1200, %v40
  %v1202 = vtanh.pop %v1201
  %v1203 = vmul.f32 %v1202, %v40
  %v1204 = vadd.f32 %v1203, %v41
  %v1205 = vmul.f32 %v1204, %v1140
  %1207 = vrot.lane.b32.xlu0 %v1204, 64
  %v1208 = vpop.permute.xlu0 %1207
  %v1210 = vmul.f32 %v1204, %v1208
  %1212 = vrot.lane.b32.xlu0 %v1210, 32
  %v1213 = vpop.permute.xlu0 %1212
  %v1215 = vadd.f32 %v1205, %v1213
  %v1216 = vtanh.pop %v1215
  %1218 = vrot.lane.b32.xlu0 %v1216, 64
  %v1219 = vpop.permute.xlu0 %1218
  %v1221 = vmul.f32 %v1204, %v1219
  %1223 = vrot.lane.b32.xlu0 %v1221, 32
  %v1224 = vpop.permute.xlu0 %1223
  %1226 = vst.msk [vmem:[%s488] sm:$0xff] %vm188, %v1224
  %v1227 = vld [vmem:[%s490] sm:$0xff]
  %v1228 = vpack.c.bf16 %v1221, %v1221
  %1230 = vrot.lane.b32.xlu0 %v1228, 32
  %v1231 = vpop.permute.xlu0 %1230
  %v1233 = vsel %vm188, %v1231, 0
  %1235 = vmatprep.subr.bf16.mxu0 0
  %1236 = vmatpush1.bf16.msra.mxu0 %v931
  %1237 = vmatprep.subr.bf16.mxu0 0
  %1238 = vmatpush1.bf16.msra.mxu0 %v932
  %1239 = vmatprep.subr.bf16.mxu0 0
  %1240 = vmatpush1.bf16.msra.mxu0 0
  %1241 = vmatprep.subr.bf16.mxu0 0
  %1242 = vmatpush1.bf16.msra.mxu0 0
  %1243 = vmatprep.subr.bf16.mxu0 0
  %1244 = vmatpush1.bf16.msra.mxu0 0
  %1245 = vmatprep.subr.bf16.mxu0 0
  %1246 = vmatpush1.bf16.msra.mxu0 0
  %1247 = vmatprep.subr.bf16.mxu0 0
  %1248 = vmatpush1.bf16.msra.mxu0 0
  %1249 = vmatprep.subr.bf16.mxu0 0
  %1250 = vmatpush1.bf16.msra.mxu0 0
  %1251 = vmatprep.subr.bf16.mxu0 0
  %1252 = vmatpush1.bf16.msra.mxu0 0
  %1253 = vmatprep.subr.bf16.mxu0 0
  %1254 = vmatpush1.bf16.msra.mxu0 0
  %1255 = vmatprep.subr.bf16.mxu0 0
  %1256 = vmatpush1.bf16.msra.mxu0 0
  %1257 = vmatprep.subr.bf16.mxu0 0
  %1258 = vmatpush1.bf16.msra.mxu0 0
  %1259 = vmatprep.subr.bf16.mxu0 0
  %1260 = vmatpush1.bf16.msra.mxu0 0
  %1261 = vmatprep.subr.bf16.mxu0 0
  %1262 = vmatpush1.bf16.msra.mxu0 0
  %1263 = vmatprep.subr.bf16.mxu0 0
  %1264 = vmatpush1.bf16.msra.mxu0 0
  %1265 = vmatprep.subr.bf16.mxu0 0
  %1266 = vmatpush1.bf16.msra.mxu0 0
  %1267 = vmatprep.mubr.bf16.mxu0 0
  %1268 = vmatmul.mubr.bf16.gmra.mrb[0].mxu0 %v1233
  %v1269 = vpop.f32.mrb[0].mxu0
  %v1270 = vadd.f32 0.0, %v1269
  %v1271 = vpop.f32.mrb[0].mxu0
  %v1272 = vpop.f32.mrb[0].mxu0
  %v1273 = vpop.f32.mrb[0].mxu0
  %1274 = vdwg.mxu0
  %v1275 = vadd.f32 %v1227, %v1270
  %v1276 = vmul.f32 %v1275, %v40
  %v1277 = vtanh.pop %v1276
  %v1278 = vmul.f32 %v1277, %v40
  %v1279 = vadd.f32 %v1278, %v41
  %v1280 = vmul.f32 %v1279, %v1215
  %1282 = vrot.lane.b32.xlu0 %v1279, 64
  %v1283 = vpop.permute.xlu0 %1282
  %v1285 = vmul.f32 %v1279, %v1283
  %1287 = vrot.lane.b32.xlu0 %v1285, 32
  %v1288 = vpop.permute.xlu0 %1287
  %v1290 = vadd.f32 %v1280, %v1288
  %v1291 = vtanh.pop %v1290
  %1293 = vrot.lane.b32.xlu0 %v1291, 64
  %v1294 = vpop.permute.xlu0 %1293
  %v1296 = vmul.f32 %v1279, %v1294
  %1298 = vrot.lane.b32.xlu0 %v1296, 32
  %v1299 = vpop.permute.xlu0 %1298
  %1301 = vst.msk [vmem:[%s565] sm:$0xff] %vm188, %v1299
  %v1302 = vld [vmem:[%s567] sm:$0xff]
  %v1303 = vpack.c.bf16 %v1296, %v1296
  %1305 = vrot.lane.b32.xlu0 %v1303, 32
  %v1306 = vpop.permute.xlu0 %1305
  %v1308 = vsel %vm188, %v1306, 0
  %1310 = vmatprep.subr.bf16.mxu0 0
  %1311 = vmatpush1.bf16.msra.mxu0 %v931
  %1312 = vmatprep.subr.bf16.mxu0 0
  %1313 = vmatpush1.bf16.msra.mxu0 %v932
  %1314 = vmatprep.subr.bf16.mxu0 0
  %1315 = vmatpush1.bf16.msra.mxu0 0
  %1316 = vmatprep.subr.bf16.mxu0 0
  %1317 = vmatpush1.bf16.msra.mxu0 0
  %1318 = vmatprep.subr.bf16.mxu0 0
  %1319 = vmatpush1.bf16.msra.mxu0 0
  %1320 = vmatprep.subr.bf16.mxu0 0
  %1321 = vmatpush1.bf16.msra.mxu0 0
  %1322 = vmatprep.subr.bf16.mxu0 0
  %1323 = vmatpush1.bf16.msra.mxu0 0
  %1324 = vmatprep.subr.bf16.mxu0 0
  %1325 = vmatpush1.bf16.msra.mxu0 0
  %1326 = vmatprep.subr.bf16.mxu0 0
  %1327 = vmatpush1.bf16.msra.mxu0 0
  %1328 = vmatprep.subr.bf16.mxu0 0
  %1329 = vmatpush1.bf16.msra.mxu0 0
  %1330 = vmatprep.subr.bf16.mxu0 0
  %1331 = vmatpush1.bf16.msra.mxu0 0
  %1332 = vmatprep.subr.bf16.mxu0 0
  %1333 = vmatpush1.bf16.msra.mxu0 0
  %1334 = vmatprep.subr.bf16.mxu0 0
  %1335 = vmatpush1.bf16.msra.mxu0 0
  %1336 = vmatprep.subr.bf16.mxu0 0
  %1337 = vmatpush1.bf16.msra.mxu0 0
  %1338 = vmatprep.subr.bf16.mxu0 0
  %1339 = vmatpush1.bf16.msra.mxu0 0
  %1340 = vmatprep.subr.bf16.mxu0 0
  %1341 = vmatpush1.bf16.msra.mxu0 0
  %1342 = vmatprep.mubr.bf16.mxu0 0
  %1343 = vmatmul.mubr.bf16.gmra.mrb[0].mxu0 %v1308
  %v1344 = vpop.f32.mrb[0].mxu0
  %v1345 = vadd.f32 0.0, %v1344
  %v1346 = vpop.f32.mrb[0].mxu0
  %v1347 = vpop.f32.mrb[0].mxu0
  %v1348 = vpop.f32.mrb[0].mxu0
  %1349 = vdwg.mxu0
  %v1350 = vadd.f32 %v1302, %v1345
  %v1351 = vmul.f32 %v1350, %v40
  %v1352 = vtanh.pop %v1351
  %v1353 = vmul.f32 %v1352, %v40
  %v1354 = vadd.f32 %v1353, %v41
  %v1355 = vmul.f32 %v1354, %v1290
  %1357 = vrot.lane.b32.xlu0 %v1354, 64
  %v1358 = vpop.permute.xlu0 %1357
  %v1360 = vmul.f32 %v1354, %v1358
  %1362 = vrot.lane.b32.xlu0 %v1360, 32
  %v1363 = vpop.permute.xlu0 %1362
  %v1365 = vadd.f32 %v1355, %v1363
  %v1366 = vtanh.pop %v1365
  %1368 = vrot.lane.b32.xlu0 %v1366, 64
  %v1369 = vpop.permute.xlu0 %1368
  %v1371 = vmul.f32 %v1354, %v1369
  %1373 = vrot.lane.b32.xlu0 %v1371, 32
  %v1374 = vpop.permute.xlu0 %1373
  %1376 = vst.msk [vmem:[%s642] sm:$0xff] %vm188, %v1374
  %v1377 = vld [vmem:[%s644] sm:$0xff]
  %v1378 = vpack.c.bf16 %v1371, %v1371
  %1380 = vrot.lane.b32.xlu0 %v1378, 32
  %v1381 = vpop.permute.xlu0 %1380
  %v1383 = vsel %vm188, %v1381, 0
  %1385 = vmatprep.subr.bf16.mxu0 0
  %1386 = vmatpush1.bf16.msra.mxu0 %v931
  %1387 = vmatprep.subr.bf16.mxu0 0
  %1388 = vmatpush1.bf16.msra.mxu0 %v932
  %1389 = vmatprep.subr.bf16.mxu0 0
  %1390 = vmatpush1.bf16.msra.mxu0 0
  %1391 = vmatprep.subr.bf16.mxu0 0
  %1392 = vmatpush1.bf16.msra.mxu0 0
  %1393 = vmatprep.subr.bf16.mxu0 0
  %1394 = vmatpush1.bf16.msra.mxu0 0
  %1395 = vmatprep.subr.bf16.mxu0 0
  %1396 = vmatpush1.bf16.msra.mxu0 0
  %1397 = vmatprep.subr.bf16.mxu0 0
  %1398 = vmatpush1.bf16.msra.mxu0 0
  %1399 = vmatprep.subr.bf16.mxu0 0
  %1400 = vmatpush1.bf16.msra.mxu0 0
  %1401 = vmatprep.subr.bf16.mxu0 0
  %1402 = vmatpush1.bf16.msra.mxu0 0
  %1403 = vmatprep.subr.bf16.mxu0 0
  %1404 = vmatpush1.bf16.msra.mxu0 0
  %1405 = vmatprep.subr.bf16.mxu0 0
  %1406 = vmatpush1.bf16.msra.mxu0 0
  %1407 = vmatprep.subr.bf16.mxu0 0
  %1408 = vmatpush1.bf16.msra.mxu0 0
  %1409 = vmatprep.subr.bf16.mxu0 0
  %1410 = vmatpush1.bf16.msra.mxu0 0
  %1411 = vmatprep.subr.bf16.mxu0 0
  %1412 = vmatpush1.bf16.msra.mxu0 0
  %1413 = vmatprep.subr.bf16.mxu0 0
  %1414 = vmatpush1.bf16.msra.mxu0 0
  %1415 = vmatprep.subr.bf16.mxu0 0
  %1416 = vmatpush1.bf16.msra.mxu0 0
  %1417 = vmatprep.mubr.bf16.mxu0 0
  %1418 = vmatmul.mubr.bf16.gmra.mrb[0].mxu0 %v1383
  %v1419 = vpop.f32.mrb[0].mxu0
  %v1420 = vadd.f32 0.0, %v1419
  %v1421 = vpop.f32.mrb[0].mxu0
  %v1422 = vpop.f32.mrb[0].mxu0
  %v1423 = vpop.f32.mrb[0].mxu0
  %1424 = vdwg.mxu0
  %v1425 = vadd.f32 %v1377, %v1420
  %v1426 = vmul.f32 %v1425, %v40
  %v1427 = vtanh.pop %v1426
  %v1428 = vmul.f32 %v1427, %v40
  %v1429 = vadd.f32 %v1428, %v41
  %v1430 = vmul.f32 %v1429, %v1365
  %1432 = vrot.lane.b32.xlu0 %v1429, 64
  %v1433 = vpop.permute.xlu0 %1432
  %v1435 = vmul.f32 %v1429, %v1433
  %1437 = vrot.lane.b32.xlu0 %v1435, 32
  %v1438 = vpop.permute.xlu0 %1437
  %v1440 = vadd.f32 %v1430, %v1438
  %v1441 = vtanh.pop %v1440
  %1443 = vrot.lane.b32.xlu0 %v1441, 64
  %v1444 = vpop.permute.xlu0 %1443
  %v1446 = vmul.f32 %v1429, %v1444
  %1448 = vrot.lane.b32.xlu0 %v1446, 32
  %v1449 = vpop.permute.xlu0 %1448
  %1451 = vst.msk [vmem:[%s719] sm:$0xff] %vm188, %v1449
  %v1452 = vld [vmem:[%s721] sm:$0xff]
  %v1453 = vpack.c.bf16 %v1446, %v1446
  %1455 = vrot.lane.b32.xlu0 %v1453, 32
  %v1456 = vpop.permute.xlu0 %1455
  %v1458 = vsel %vm188, %v1456, 0
  %1460 = vmatprep.subr.bf16.mxu0 0
  %1461 = vmatpush1.bf16.msra.mxu0 %v931
  %1462 = vmatprep.subr.bf16.mxu0 0
  %1463 = vmatpush1.bf16.msra.mxu0 %v932
  %1464 = vmatprep.subr.bf16.mxu0 0
  %1465 = vmatpush1.bf16.msra.mxu0 0
  %1466 = vmatprep.subr.bf16.mxu0 0
  %1467 = vmatpush1.bf16.msra.mxu0 0
  %1468 = vmatprep.subr.bf16.mxu0 0
  %1469 = vmatpush1.bf16.msra.mxu0 0
  %1470 = vmatprep.subr.bf16.mxu0 0
  %1471 = vmatpush1.bf16.msra.mxu0 0
  %1472 = vmatprep.subr.bf16.mxu0 0
  %1473 = vmatpush1.bf16.msra.mxu0 0
  %1474 = vmatprep.subr.bf16.mxu0 0
  %1475 = vmatpush1.bf16.msra.mxu0 0
  %1476 = vmatprep.subr.bf16.mxu0 0
  %1477 = vmatpush1.bf16.msra.mxu0 0
  %1478 = vmatprep.subr.bf16.mxu0 0
  %1479 = vmatpush1.bf16.msra.mxu0 0
  %1480 = vmatprep.subr.bf16.mxu0 0
  %1481 = vmatpush1.bf16.msra.mxu0 0
  %1482 = vmatprep.subr.bf16.mxu0 0
  %1483 = vmatpush1.bf16.msra.mxu0 0
  %1484 = vmatprep.subr.bf16.mxu0 0
  %1485 = vmatpush1.bf16.msra.mxu0 0
  %1486 = vmatprep.subr.bf16.mxu0 0
  %1487 = vmatpush1.bf16.msra.mxu0 0
  %1488 = vmatprep.subr.bf16.mxu0 0
  %1489 = vmatpush1.bf16.msra.mxu0 0
  %1490 = vmatprep.subr.bf16.mxu0 0
  %1491 = vmatpush1.bf16.msra.mxu0 0
  %1492 = vmatprep.mubr.bf16.mxu0 0
  %1493 = vmatmul.mubr.bf16.gmra.mrb[0].mxu0 %v1458
  %v1494 = vpop.f32.mrb[0].mxu0
  %v1495 = vadd.f32 0.0, %v1494
  %v1496 = vpop.f32.mrb[0].mxu0
  %v1497 = vpop.f32.mrb[0].mxu0
  %v1498 = vpop.f32.mrb[0].mxu0
  %1499 = vdwg.mxu0
  %v1500 = vadd.f32 %v1452, %v1495
  %v1501 = vmul.f32 %v1500, %v40
  %v1502 = vtanh.pop %v1501
  %v1503 = vmul.f32 %v1502, %v40
  %v1504 = vadd.f32 %v1503, %v41
  %v1505 = vmul.f32 %v1504, %v1440
  %1507 = vrot.lane.b32.xlu0 %v1504, 64
  %v1508 = vpop.permute.xlu0 %1507
  %v1510 = vmul.f32 %v1504, %v1508
  %1512 = vrot.lane.b32.xlu0 %v1510, 32
  %v1513 = vpop.permute.xlu0 %1512
  %v1515 = vadd.f32 %v1505, %v1513
  %v1516 = vtanh.pop %v1515
  %1518 = vrot.lane.b32.xlu0 %v1516, 64
  %v1519 = vpop.permute.xlu0 %1518
  %v1521 = vmul.f32 %v1504, %v1519
  %1523 = vrot.lane.b32.xlu0 %v1521, 32
  %v1524 = vpop.permute.xlu0 %1523
  %1526 = vst.msk [vmem:[%s796] sm:$0xff] %vm188, %v1524
  %v1527 = vld [vmem:[#allocation3] sm:$0xff]
  %v1528 = vld [vmem:[#allocation3 + $0x8] sm:$0xff]
  %v1529 = vld [vmem:[#allocation3 + $0x10] sm:$0xff]
  %v1530 = vld [vmem:[#allocation3 + $0x18] sm:$0xff]
  %v1531 = vld [vmem:[#allocation3 + $0x20] sm:$0xff]
  %v1532 = vld [vmem:[#allocation3 + $0x28] sm:$0xff]
  %v1533 = vld [vmem:[#allocation3 + $0x30] sm:$0xff]
  %v1534 = vld [vmem:[#allocation3 + $0x38] sm:$0xff]
  %v1535 = vld [vmem:[%s7] sm:$0xff]
  %v1536 = vld [vmem:[%s7 + $0x8] sm:$0xff]
  %v1537 = vld [vmem:[%s7 + $0x10] sm:$0xff]
  %v1538 = vld [vmem:[%s7 + $0x18] sm:$0xff]
  %v1539 = vld [vmem:[#allocation4] sm:$0x1]
  %v1541 = vlaneseq
  %v1542 = vshrl.u32 %v1541, 7
  %v1543 = vsub.s32 0, %v1542
  %v1544 = vrot.slane %v1539, %v1543
  %v1547 = vsel %vm188, %v1527, 0
  %v1550 = vsel %vm188, %v1528, 0
  %v1553 = vsel %vm188, %v1529, 0
  %v1556 = vsel %vm188, %v1530, 0
  %v1559 = vsel %vm188, %v1531, 0
  %v1562 = vsel %vm188, %v1532, 0
  %v1565 = vsel %vm188, %v1533, 0
  %v1568 = vsel %vm188, %v1534, 0
  %1570 = vmatprep.subr.mxu0 0.0
  %1571 = vmatpush1.msra.mxu0 %v1535
  %1572 = vmatprep.subr.mxu0 0.0
  %1573 = vmatpush1.msra.mxu0 %v1536
  %1574 = vmatprep.subr.mxu0 0.0
  %1575 = vmatpush1.msra.mxu0 %v1537
  %1576 = vmatprep.subr.mxu0 0.0
  %1577 = vmatpush1.msra.mxu0 %v1538
  %1578 = vmatprep.subr.mxu0 0.0
  %1579 = vmatpush1.msra.mxu0 0.0
  %1580 = vmatprep.subr.mxu0 0.0
  %1581 = vmatpush1.msra.mxu0 0.0
  %1582 = vmatprep.subr.mxu0 0.0
  %1583 = vmatpush1.msra.mxu0 0.0
  %1584 = vmatprep.subr.mxu0 0.0
  %1585 = vmatpush1.msra.mxu0 0.0
  %1586 = vmatprep.subr.mxu0 0.0
  %1587 = vmatpush1.msra.mxu0 0.0
  %1588 = vmatprep.subr.mxu0 0.0
  %1589 = vmatpush1.msra.mxu0 0.0
  %1590 = vmatprep.subr.mxu0 0.0
  %1591 = vmatpush1.msra.mxu0 0.0
  %1592 = vmatprep.subr.mxu0 0.0
  %1593 = vmatpush1.msra.mxu0 0.0
  %1594 = vmatprep.subr.mxu0 0.0
  %1595 = vmatpush1.msra.mxu0 0.0
  %1596 = vmatprep.subr.mxu0 0.0
  %1597 = vmatpush1.msra.mxu0 0.0
  %1598 = vmatprep.subr.mxu0 0.0
  %1599 = vmatpush1.msra.mxu0 0.0
  %1600 = vmatprep.subr.mxu0 0.0
  %1601 = vmatpush1.msra.mxu0 0.0
  %1602 = vmatprep.subr.mxu0 0.0
  %1603 = vmatpush1.msra.mxu0 0.0
  %1604 = vmatprep.subr.mxu0 0.0
  %1605 = vmatpush1.msra.mxu0 0.0
  %1606 = vmatprep.subr.mxu0 0.0
  %1607 = vmatpush1.msra.mxu0 0.0
  %1608 = vmatprep.subr.mxu0 0.0
  %1609 = vmatpush1.msra.mxu0 0.0
  %1610 = vmatprep.subr.mxu0 0.0
  %1611 = vmatpush1.msra.mxu0 0.0
  %1612 = vmatprep.subr.mxu0 0.0
  %1613 = vmatpush1.msra.mxu0 0.0
  %1614 = vmatprep.subr.mxu0 0.0
  %1615 = vmatpush1.msra.mxu0 0.0
  %1616 = vmatprep.subr.mxu0 0.0
  %1617 = vmatpush1.msra.mxu0 0.0
  %1618 = vmatprep.subr.mxu0 0.0
  %1619 = vmatpush1.msra.mxu0 0.0
  %1620 = vmatprep.subr.mxu0 0.0
  %1621 = vmatpush1.msra.mxu0 0.0
  %1622 = vmatprep.subr.mxu0 0.0
  %1623 = vmatpush1.msra.mxu0 0.0
  %1624 = vmatprep.subr.mxu0 0.0
  %1625 = vmatpush1.msra.mxu0 0.0
  %1626 = vmatprep.subr.mxu0 0.0
  %1627 = vmatpush1.msra.mxu0 0.0
  %1628 = vmatprep.subr.mxu0 0.0
  %1629 = vmatpush1.msra.mxu0 0.0
  %1630 = vmatprep.subr.mxu0 0.0
  %1631 = vmatpush1.msra.mxu0 0.0
  %1632 = vmatprep.subr.mxu0 0.0
  %1633 = vmatpush1.msra.mxu0 0.0
  %1634 = vmatprep.mubr.f32.mxu0 0.0
  %1635 = vmatmul.mubr.f32.gmra.mrb[0].mxu0 %v1547
  %v1636 = vpop.f32.mrb[0].mxu0
  %v1637 = vadd.f32 %v1544, %v1636
  %v1638 = vpop.f32.mrb[0].mxu0
  %1639 = vmatprep.mubr.f32.mxu0 0.0
  %1640 = vmatmul.mubr.f32.gmra.mrb[0].mxu0 %v1550
  %v1641 = vpop.f32.mrb[0].mxu0
  %v1642 = vadd.f32 %v1544, %v1641
  %v1643 = vpop.f32.mrb[0].mxu0
  %1644 = vmatprep.mubr.f32.mxu0 0.0
  %1645 = vmatmul.mubr.f32.gmra.mrb[0].mxu0 %v1553
  %v1646 = vpop.f32.mrb[0].mxu0
  %v1647 = vadd.f32 %v1544, %v1646
  %v1648 = vpop.f32.mrb[0].mxu0
  %1649 = vmatprep.mubr.f32.mxu0 0.0
  %1650 = vmatmul.mubr.f32.gmra.mrb[0].mxu0 %v1556
  %v1651 = vpop.f32.mrb[0].mxu0
  %v1652 = vadd.f32 %v1544, %v1651
  %v1653 = vpop.f32.mrb[0].mxu0
  %1654 = vmatprep.mubr.f32.mxu0 0.0
  %1655 = vmatmul.mubr.f32.gmra.mrb[0].mxu0 %v1559
  %v1656 = vpop.f32.mrb[0].mxu0
  %v1657 = vadd.f32 %v1544, %v1656
  %v1658 = vpop.f32.mrb[0].mxu0
  %1659 = vmatprep.mubr.f32.mxu0 0.0
  %1660 = vmatmul.mubr.f32.gmra.mrb[0].mxu0 %v1562
  %v1661 = vpop.f32.mrb[0].mxu0
  %v1662 = vadd.f32 %v1544, %v1661
  %v1663 = vpop.f32.mrb[0].mxu0
  %1664 = vmatprep.mubr.f32.mxu0 0.0
  %1665 = vmatmul.mubr.f32.gmra.mrb[0].mxu0 %v1565
  %v1666 = vpop.f32.mrb[0].mxu0
  %v1667 = vadd.f32 %v1544, %v1666
  %v1668 = vpop.f32.mrb[0].mxu0
  %1669 = vmatprep.mubr.f32.mxu0 0.0
  %1670 = vmatmul.mubr.f32.gmra.mrb[0].mxu0 %v1568
  %v1671 = vpop.f32.mrb[0].mxu0
  %v1672 = vadd.f32 %v1544, %v1671
  %v1673 = vpop.f32.mrb[0].mxu0
  %1674 = vdwg.mxu0
  %vm1675 = vcmask 7168
  %1676 = vst.msk [vmem:[%s9] sm:$0xff] %vm1675, %v1637
  %1677 = vst.msk [vmem:[%s9 + $0x8] sm:$0xff] %vm1675, %v1642
  %1678 = vst.msk [vmem:[%s9 + $0x10] sm:$0xff] %vm1675, %v1647
  %1679 = vst.msk [vmem:[%s9 + $0x18] sm:$0xff] %vm1675, %v1652
  %1680 = vst.msk [vmem:[%s9 + $0x20] sm:$0xff] %vm1675, %v1657
  %1681 = vst.msk [vmem:[%s9 + $0x28] sm:$0xff] %vm1675, %v1662
  %1682 = vst.msk [vmem:[%s9 + $0x30] sm:$0xff] %vm1675, %v1667
  %1683 = vst.msk [vmem:[%s9 + $0x38] sm:$0xff] %vm1675, %v1672
  // Predicated region
  $region38: #{lstm_model_forward.1} parent=0 // pred_check
    _
  $region39: #{lstm_model_forward.1} parent=0 // pred_check_branch
    %1685 = sbr.rel (0) target = $region41
  $region40: #{lstm_model_forward.1} parent=0 // pred_region
    _
  $region41: #{lstm_model_forward.1} parent=0 // pred_fallthru
    _
  // Predicated region
  $region42: #{lstm_model_forward.1} parent=0 // pred_check
    _
  $region43: #{lstm_model_forward.1} parent=0 // pred_check_branch
    %1687 = sbr.rel (0) target = $region45
  $region44: #{lstm_model_forward.1} parent=0 // pred_region
    _
  $region45: #{lstm_model_forward.1} parent=0 // pred_fallthru
    _

</llo_original>
